<compile_context>
chip_gen: v7x
topology: tpu7x:2x2x1
jax: 0.10.0
libtpu: 0.0.40
codegen_flags: <defaults>
</compile_context>

<pallas_src>
import jax
import jax.numpy as jnp
from jax.experimental import pallas as pl
from jax.experimental.pallas import tpu as pltpu


def _cdiv(a, b):
    return (a + b - 1) // b


def encoder_kernel(x_ref, w1_ref, b1_ref, w2t_ref, b2_ref, w3t_ref, b3_ref,
                   out_ref, slab_ref):
    tbn, n = x_ref.shape            # (TB*N, N)
    h = w1_ref.shape[1]             # H
    tb = tbn // n                   # TB (static)

    # ---- Stage 1: node_proj for all TB batch elements in one matmul --------
    a = jnp.dot(x_ref[...], w1_ref[...],
                preferred_element_type=jnp.float32) + b1_ref[...]
    a = jnp.maximum(a, 0.0)                                  # (TB*N, H)

    # ---- Repack batch onto the lane axis: slab[:, b*H:(b+1)*H] = A[b] ------
    # (static unroll; small VMEM-internal sub-tile stores)
    for b in range(tb):
        slab_ref[:, b * h:(b + 1) * h] = a[b * n:(b + 1) * n, :]
    a_st = slab_ref[...]                                     # (N, TB*H)

    # ---- Stage 2: first downsampling Linear + ReLU (single wide matmul) ----
    # b2 varies along the sublane (N) axis, so a (N, 1) column broadcasts over
    # the TB*H lanes — the natural layout for this stacked formulation.
    hm = jnp.dot(w2t_ref[...], a_st,
                 preferred_element_type=jnp.float32) + b2_ref[...]
    hm = jnp.maximum(hm, 0.0)                                # (N, TB*H)

    # ---- Stage 3: second downsampling Linear (single wide matmul) ----------
    out = jnp.dot(w3t_ref[...], hm,
                  preferred_element_type=jnp.float32) + b3_ref[...]
    out_ref[0] = out.astype(out_ref.dtype)                   # (C, TB*H) lane-dense


def _make_call(nb, tb, n, h, c, dtype, single_buffer_weights):
    def const_spec(shape):
        idx = lambda i: (0,) * len(shape)
        if single_buffer_weights:
            # Constant index map -> block never changes; single buffer halves
            # the VMEM footprint of the resident weights/biases.
            return pl.BlockSpec(shape, idx, pipeline_mode=pl.Buffered(1))
        return pl.BlockSpec(shape, idx)

    return pl.pallas_call(
        encoder_kernel,
        out_shape=jax.ShapeDtypeStruct((nb, c, tb * h), dtype),
        grid_spec=pltpu.PrefetchScalarGridSpec(
            num_scalar_prefetch=0,
            grid=(nb,),
            in_specs=[
                # TB*N rows of the batch-flattened edge matrices per step.
                pl.BlockSpec((tb * n, n), lambda i: (i, 0)),
                const_spec((n, h)),     # W1
                const_spec((1, h)),     # b1 (row: broadcasts over TB*N rows)
                const_spec((n, n)),     # W2^T
                const_spec((n, 1)),     # b2 (column: broadcasts over TB*H lanes)
                const_spec((c, n)),     # W3^T
                const_spec((c, 1)),     # b3 (column)
            ],
            out_specs=pl.BlockSpec((1, c, tb * h), lambda i: (i, 0, 0)),
            scratch_shapes=[pltpu.VMEM((n, tb * h), jnp.float32)],
        ),
        compiler_params=pltpu.CompilerParams(
            dimension_semantics=("parallel",),
        ),
    )


def _choose_tb(batch, h, lane_target=256):
    """Batch elements stacked per grid step so the lane width is ~lane_target
    (256 = full v6e/v7x MXU width; >=128 suffices on v5e), while keeping
    >= 2 grid steps for v7x's two TensorCores when the batch allows."""
    tb = max(1, lane_target // max(h, 1))
    tb = min(tb, max(batch, 1))
    while tb > 1 and _cdiv(batch, tb) < 2 and tb * h >= 2 * 128:
        tb //= 2
    return tb


def encoder_forward(x, params, tb=None):
    """x: (B, N, N) float32 edge matrices. Returns (B, C, H)."""
    w1, b1, w2, b2, w3, b3 = params
    B, N, N2 = x.shape
    assert N == N2, "edge_mtx must be square (in_dim x in_dim)"
    H = w1.shape[1]
    C = w3.shape[1]
    dtype = x.dtype

    if tb is None:
        tb = _choose_tb(B, H)
    nb = _cdiv(B, tb)
    b_pad = nb * tb
    if b_pad != B:
        x = jnp.pad(x, ((0, b_pad - B), (0, 0), (0, 0)))

    # Pure-layout glue (runs as cheap XLA ops, not in the kernel):
    #  - flatten the batch axis into the row axis so stage 1 is one wide matmul
    #  - pre-transpose downsampling weights for the transposed formulation
    #  - 2-D biases shaped for direct broadcast inside the kernel
    # Note: (tb*N, N) block needs tb*N % 8 == 0 (holds whenever N % 8 == 0).
    x2d = x.reshape(b_pad * N, N)
    w2t = w2.T                       # (N, N)
    w3t = w3.T                       # (C, N)
    b1r = b1.reshape(1, H)
    b2c = b2.reshape(N, 1)
    b3c = b3.reshape(C, 1)
    args = (x2d, w1, b1r, w2t, b2c, w3t, b3c)

    try:
        out_packed = _make_call(nb, tb, N, H, C, dtype, True)(*args)
    except Exception:
        # pipeline_mode=pl.Buffered(1) not supported by this build: fall back
        # to default double-buffered weights (a few extra KiB of VMEM here).
        out_packed = _make_call(nb, tb, N, H, C, dtype, False)(*args)

    # Unpack lane-stacked output (nb, C, TB*H) -> (B, C, H).
    out = out_packed.reshape(nb, C, tb, H).transpose(0, 2, 1, 3).reshape(b_pad, C, H)
    return out[:B]


def init_params(key, in_dim, hidden_dim, cluster_number):
    """Deterministic init mimicking torch.nn.Linear (uniform +/- 1/sqrt(fan_in))."""
    k1, k2, k3, k4, k5, k6 = jax.random.split(key, 6)

    def lin(kw, kb, fan_in, fan_out):
        bound = 1.0 / jnp.sqrt(fan_in)
        w = jax.random.uniform(kw, (fan_in, fan_out), jnp.float32, -bound, bound)
        b = jax.random.uniform(kb, (fan_out,), jnp.float32, -bound, bound)
        return w, b

    w1, b1 = lin(k1, k2, in_dim, hidden_dim)        # node_proj Linear
    w2, b2 = lin(k3, k4, in_dim, in_dim)            # downsampling Linear 1
    w3, b3 = lin(k5, k6, in_dim, cluster_number)    # downsampling Linear 2
    return (w1, b1, w2, b2, w3, b3)


def encoder_reference(x, params):
    """Pure-JAX reference mirroring the PyTorch forward."""
    w1, b1, w2, b2, w3, b3 = params
    node_feat = jax.nn.relu(jnp.einsum("bnm,mh->bnh", x, w1) + b1)   # (B, N, H)
    t = jnp.transpose(node_feat, (0, 2, 1))                          # (B, H, N)
    h = jax.nn.relu(jnp.einsum("bhn,nm->bhm", t, w2) + b2)           # (B, H, N)
    latent = jnp.einsum("bhn,nc->bhc", h, w3) + b3                   # (B, H, C)
    return jnp.transpose(latent, (0, 2, 1))                          # (B, C, H)


if __name__ == "__main__":
    B = 16               # batch: TB=8 stacked per grid step -> 2 parallel steps
    in_dim = 16          # N (edge matrix is in_dim x in_dim)
    hidden_dim = 32      # H (TB*H = 256 lanes: full MXU width on v6e/v7x)
    cluster_number = 8   # C

    key = jax.random.PRNGKey(0)
    kx, kp = jax.random.split(key)
    x = jax.random.normal(kx, (B, in_dim, in_dim), dtype=jnp.float32)
    params = init_params(kp, in_dim, hidden_dim, cluster_number)

    out = jax.block_until_ready(encoder_forward(x, params))
    ref = encoder_reference(x, params)

    assert out.shape == (B, cluster_number, hidden_dim), out.shape
    assert jnp.allclose(out, ref, atol=1e-5, rtol=1e-5), float(jnp.max(jnp.abs(out - ref)))

    print("KERNEL_OK")
</pallas_src>

<mosaic_0001>
module attributes {stable_mosaic.version = 11 : i64} {
  func.func @encoder_kernel(%arg0: i32, %arg1: memref<128x16xf32, #tpu.memory_space<vmem>>, %arg2: memref<16x32xf32, #tpu.memory_space<vmem>>, %arg3: memref<1x32xf32, #tpu.memory_space<vmem>>, %arg4: memref<16x16xf32, #tpu.memory_space<vmem>>, %arg5: memref<16x1xf32, #tpu.memory_space<vmem>>, %arg6: memref<8x16xf32, #tpu.memory_space<vmem>>, %arg7: memref<8x1xf32, #tpu.memory_space<vmem>>, %arg8: memref<1x8x256xf32, #tpu.memory_space<vmem>>, %arg9: memref<16x256xf32, #tpu.memory_space<vmem>>) attributes {dimension_semantics = [#tpu.dimension_semantics<parallel>], iteration_bounds = array<i64: 2>, scalar_prefetch = 0 : i64, scratch_operands = 1 : i64, tpu.core_type = #tpu.core_type<tc>, window_params = [{transform_indices = @transform_0, window_bounds = array<i64: 128, 16>}, {pipeline_mode = #tpu.pipeline_mode<synchronous>, transform_indices = @transform_1, window_bounds = array<i64: 16, 32>}, {pipeline_mode = #tpu.pipeline_mode<synchronous>, transform_indices = @transform_2, window_bounds = array<i64: 1, 32>}, {pipeline_mode = #tpu.pipeline_mode<synchronous>, transform_indices = @transform_3, window_bounds = array<i64: 16, 16>}, {pipeline_mode = #tpu.pipeline_mode<synchronous>, transform_indices = @transform_4, window_bounds = array<i64: 16, 1>}, {pipeline_mode = #tpu.pipeline_mode<synchronous>, transform_indices = @transform_5, window_bounds = array<i64: 8, 16>}, {pipeline_mode = #tpu.pipeline_mode<synchronous>, transform_indices = @transform_6, window_bounds = array<i64: 8, 1>}, {transform_indices = @transform_7, window_bounds = array<i64: 1, 8, 256>}]} {
    %c0 = arith.constant 0 : index
    %c0_0 = arith.constant 0 : index
    %0 = vector.load %arg1[%c0, %c0_0] : memref<128x16xf32, #tpu.memory_space<vmem>>, vector<128x16xf32>
    %c0_1 = arith.constant 0 : index
    %c0_2 = arith.constant 0 : index
    %1 = vector.load %arg2[%c0_1, %c0_2] : memref<16x32xf32, #tpu.memory_space<vmem>>, vector<16x32xf32>
    %cst = arith.constant dense<0.000000e+00> : vector<128x32xf32>
    %2 = tpu.matmul %0, %1, %cst {dimension_numbers = #tpu.dot_dimension_numbers<[1], [0], [0], [1], [0, 0, 1, 1], [], []>} : vector<128x16xf32>, vector<16x32xf32>, vector<128x32xf32> -> vector<128x32xf32>
    %c0_3 = arith.constant 0 : index
    %c0_4 = arith.constant 0 : index
    %3 = vector.load %arg3[%c0_3, %c0_4] : memref<1x32xf32, #tpu.memory_space<vmem>>, vector<1x32xf32>
    %4 = vector.broadcast %3 : vector<1x32xf32> to vector<128x32xf32>
    %5 = arith.addf %2, %4 : vector<128x32xf32>
    %cst_5 = arith.constant 0.000000e+00 : f32
    %6 = vector.broadcast %cst_5 : f32 to vector<128x32xf32>
    %7 = arith.maximumf %5, %6 : vector<128x32xf32>
    %8 = vector.extract_strided_slice %7 {offsets = [0, 0], sizes = [16, 32], strides = [1, 1]} : vector<128x32xf32> to vector<16x32xf32>
    %c0_6 = arith.constant 0 : index
    %c0_7 = arith.constant 0 : index
    %9 = vector.load %arg9[%c0_6, %c0_7] : memref<16x256xf32, #tpu.memory_space<vmem>>, vector<16x32xf32>
    tpu.vector_store %arg9[%c0_6, %c0_7], %8 {strides = array<i32>} : memref<16x256xf32, #tpu.memory_space<vmem>>, vector<16x32xf32>,
    %10 = vector.extract_strided_slice %7 {offsets = [16, 0], sizes = [16, 32], strides = [1, 1]} : vector<128x32xf32> to vector<16x32xf32>
    %c0_8 = arith.constant 0 : index
    %c32 = arith.constant 32 : index
    %11 = vector.load %arg9[%c0_8, %c32] : memref<16x256xf32, #tpu.memory_space<vmem>>, vector<16x32xf32>
    tpu.vector_store %arg9[%c0_8, %c32], %10 {strides = array<i32>} : memref<16x256xf32, #tpu.memory_space<vmem>>, vector<16x32xf32>,
    %12 = vector.extract_strided_slice %7 {offsets = [32, 0], sizes = [16, 32], strides = [1, 1]} : vector<128x32xf32> to vector<16x32xf32>
    %c0_9 = arith.constant 0 : index
    %c64 = arith.constant 64 : index
    %13 = vector.load %arg9[%c0_9, %c64] : memref<16x256xf32, #tpu.memory_space<vmem>>, vector<16x32xf32>
    tpu.vector_store %arg9[%c0_9, %c64], %12 {strides = array<i32>} : memref<16x256xf32, #tpu.memory_space<vmem>>, vector<16x32xf32>,
    %14 = vector.extract_strided_slice %7 {offsets = [48, 0], sizes = [16, 32], strides = [1, 1]} : vector<128x32xf32> to vector<16x32xf32>
    %c0_10 = arith.constant 0 : index
    %c96 = arith.constant 96 : index
    %15 = vector.load %arg9[%c0_10, %c96] : memref<16x256xf32, #tpu.memory_space<vmem>>, vector<16x32xf32>
    tpu.vector_store %arg9[%c0_10, %c96], %14 {strides = array<i32>} : memref<16x256xf32, #tpu.memory_space<vmem>>, vector<16x32xf32>,
    %16 = vector.extract_strided_slice %7 {offsets = [64, 0], sizes = [16, 32], strides = [1, 1]} : vector<128x32xf32> to vector<16x32xf32>
    %c0_11 = arith.constant 0 : index
    %c128 = arith.constant 128 : index
    %17 = vector.load %arg9[%c0_11, %c128] : memref<16x256xf32, #tpu.memory_space<vmem>>, vector<16x32xf32>
    tpu.vector_store %arg9[%c0_11, %c128], %16 {strides = array<i32>} : memref<16x256xf32, #tpu.memory_space<vmem>>, vector<16x32xf32>,
    %18 = vector.extract_strided_slice %7 {offsets = [80, 0], sizes = [16, 32], strides = [1, 1]} : vector<128x32xf32> to vector<16x32xf32>
    %c0_12 = arith.constant 0 : index
    %c160 = arith.constant 160 : index
    %19 = vector.load %arg9[%c0_12, %c160] : memref<16x256xf32, #tpu.memory_space<vmem>>, vector<16x32xf32>
    tpu.vector_store %arg9[%c0_12, %c160], %18 {strides = array<i32>} : memref<16x256xf32, #tpu.memory_space<vmem>>, vector<16x32xf32>,
    %20 = vector.extract_strided_slice %7 {offsets = [96, 0], sizes = [16, 32], strides = [1, 1]} : vector<128x32xf32> to vector<16x32xf32>
    %c0_13 = arith.constant 0 : index
    %c192 = arith.constant 192 : index
    %21 = vector.load %arg9[%c0_13, %c192] : memref<16x256xf32, #tpu.memory_space<vmem>>, vector<16x32xf32>
    tpu.vector_store %arg9[%c0_13, %c192], %20 {strides = array<i32>} : memref<16x256xf32, #tpu.memory_space<vmem>>, vector<16x32xf32>,
    %22 = vector.extract_strided_slice %7 {offsets = [112, 0], sizes = [16, 32], strides = [1, 1]} : vector<128x32xf32> to vector<16x32xf32>
    %c0_14 = arith.constant 0 : index
    %c224 = arith.constant 224 : index
    %23 = vector.load %arg9[%c0_14, %c224] : memref<16x256xf32, #tpu.memory_space<vmem>>, vector<16x32xf32>
    tpu.vector_store %arg9[%c0_14, %c224], %22 {strides = array<i32>} : memref<16x256xf32, #tpu.memory_space<vmem>>, vector<16x32xf32>,
    %c0_15 = arith.constant 0 : index
    %c0_16 = arith.constant 0 : index
    %24 = vector.load %arg9[%c0_15, %c0_16] : memref<16x256xf32, #tpu.memory_space<vmem>>, vector<16x256xf32>
    %c0_17 = arith.constant 0 : index
    %c0_18 = arith.constant 0 : index
    %25 = vector.load %arg4[%c0_17, %c0_18] : memref<16x16xf32, #tpu.memory_space<vmem>>, vector<16x16xf32>
    %cst_19 = arith.constant dense<0.000000e+00> : vector<16x256xf32>
    %26 = tpu.matmul %25, %24, %cst_19 {dimension_numbers = #tpu.dot_dimension_numbers<[1], [0], [0], [1], [0, 0, 1, 1], [], []>} : vector<16x16xf32>, vector<16x256xf32>, vector<16x256xf32> -> vector<16x256xf32>
    %c0_20 = arith.constant 0 : index
    %c0_21 = arith.constant 0 : index
    %27 = vector.load %arg5[%c0_20, %c0_21] : memref<16x1xf32, #tpu.memory_space<vmem>>, vector<16x1xf32>
    %28 = vector.broadcast %27 : vector<16x1xf32> to vector<16x256xf32>
    %29 = arith.addf %26, %28 : vector<16x256xf32>
    %cst_22 = arith.constant 0.000000e+00 : f32
    %30 = vector.broadcast %cst_22 : f32 to vector<16x256xf32>
    %31 = arith.maximumf %29, %30 : vector<16x256xf32>
    %c0_23 = arith.constant 0 : index
    %c0_24 = arith.constant 0 : index
    %32 = vector.load %arg6[%c0_23, %c0_24] : memref<8x16xf32, #tpu.memory_space<vmem>>, vector<8x16xf32>
    %cst_25 = arith.constant dense<0.000000e+00> : vector<8x256xf32>
    %33 = tpu.matmul %32, %31, %cst_25 {dimension_numbers = #tpu.dot_dimension_numbers<[1], [0], [0], [1], [0, 0, 1, 1], [], []>} : vector<8x16xf32>, vector<16x256xf32>, vector<8x256xf32> -> vector<8x256xf32>
    %c0_26 = arith.constant 0 : index
    %c0_27 = arith.constant 0 : index
    %34 = vector.load %arg7[%c0_26, %c0_27] : memref<8x1xf32, #tpu.memory_space<vmem>>, vector<8x1xf32>
    %35 = vector.broadcast %34 : vector<8x1xf32> to vector<8x256xf32>
    %36 = arith.addf %33, %35 : vector<8x256xf32>
    %c0_28 = arith.constant 0 : index
    %c0_29 = arith.constant 0 : index
    %c0_30 = arith.constant 0 : index
    %37 = vector.load %arg8[%c0_28, %c0_29, %c0_30] : memref<1x8x256xf32, #tpu.memory_space<vmem>>, vector<1x8x256xf32>
    %38 = vector.shape_cast %37 : vector<1x8x256xf32> to vector<8x256xf32>
    %39 = vector.shape_cast %36 : vector<8x256xf32> to vector<1x8x256xf32>
    tpu.vector_store %arg8[%c0_28, %c0_29, %c0_30], %39 {strides = array<i32>} : memref<1x8x256xf32, #tpu.memory_space<vmem>>, vector<1x8x256xf32>,
    return
  }
  func.func @transform_0(%arg0: i32) -> (i32, i32) {
    %c0_i32 = arith.constant 0 : i32
    %c0_i32_0 = arith.constant 0 : i32
    return %arg0, %c0_i32 : i32, i32
  }
  func.func @transform_1(%arg0: i32) -> (i32, i32) {
    %c0_i32 = arith.constant 0 : i32
    %c0_i32_0 = arith.constant 0 : i32
    %c0_i32_1 = arith.constant 0 : i32
    return %c0_i32, %c0_i32_0 : i32, i32
  }
  func.func @transform_2(%arg0: i32) -> (i32, i32) {
    %c0_i32 = arith.constant 0 : i32
    %c0_i32_0 = arith.constant 0 : i32
    %c0_i32_1 = arith.constant 0 : i32
    return %c0_i32, %c0_i32_0 : i32, i32
  }
  func.func @transform_3(%arg0: i32) -> (i32, i32) {
    %c0_i32 = arith.constant 0 : i32
    %c0_i32_0 = arith.constant 0 : i32
    %c0_i32_1 = arith.constant 0 : i32
    return %c0_i32, %c0_i32_0 : i32, i32
  }
  func.func @transform_4(%arg0: i32) -> (i32, i32) {
    %c0_i32 = arith.constant 0 : i32
    %c0_i32_0 = arith.constant 0 : i32
    %c0_i32_1 = arith.constant 0 : i32
    return %c0_i32, %c0_i32_0 : i32, i32
  }
  func.func @transform_5(%arg0: i32) -> (i32, i32) {
    %c0_i32 = arith.constant 0 : i32
    %c0_i32_0 = arith.constant 0 : i32
    %c0_i32_1 = arith.constant 0 : i32
    return %c0_i32, %c0_i32_0 : i32, i32
  }
  func.func @transform_6(%arg0: i32) -> (i32, i32) {
    %c0_i32 = arith.constant 0 : i32
    %c0_i32_0 = arith.constant 0 : i32
    %c0_i32_1 = arith.constant 0 : i32
    return %c0_i32, %c0_i32_0 : i32, i32
  }
  func.func @transform_7(%arg0: i32) -> (i32, i32, i32) {
    %c0_i32 = arith.constant 0 : i32
    %c0_i32_0 = arith.constant 0 : i32
    %c0_i32_1 = arith.constant 0 : i32
    return %arg0, %c0_i32, %c0_i32_0 : i32, i32, i32
  }
}

module attributes {stable_mosaic.version = 11 : i64} {
  func.func @encoder_kernel(%arg0: i32, %arg1: memref<128x16xf32, #tpu.memory_space<vmem>>, %arg2: memref<16x32xf32, #tpu.memory_space<vmem>>, %arg3: memref<1x32xf32, #tpu.memory_space<vmem>>, %arg4: memref<16x16xf32, #tpu.memory_space<vmem>>, %arg5: memref<16x1xf32, #tpu.memory_space<vmem>>, %arg6: memref<8x16xf32, #tpu.memory_space<vmem>>, %arg7: memref<8x1xf32, #tpu.memory_space<vmem>>, %arg8: memref<1x8x256xf32, #tpu.memory_space<vmem>>, %arg9: memref<16x256xf32, #tpu.memory_space<vmem>>) attributes {dimension_semantics = [#tpu.dimension_semantics<parallel>], iteration_bounds = array<i64: 2>, scalar_prefetch = 0 : i64, scratch_operands = 1 : i64, tpu.core_type = #tpu.core_type<tc>, window_params = [{transform_indices = @transform_0, window_bounds = array<i64: 128, 16>}, {pipeline_mode = #tpu.pipeline_mode<synchronous>, transform_indices = @transform_1, window_bounds = array<i64: 16, 32>}, {pipeline_mode = #tpu.pipeline_mode<synchronous>, transform_indices = @transform_2, window_bounds = array<i64: 1, 32>}, {pipeline_mode = #tpu.pipeline_mode<synchronous>, transform_indices = @transform_3, window_bounds = array<i64: 16, 16>}, {pipeline_mode = #tpu.pipeline_mode<synchronous>, transform_indices = @transform_4, window_bounds = array<i64: 16, 1>}, {pipeline_mode = #tpu.pipeline_mode<synchronous>, transform_indices = @transform_5, window_bounds = array<i64: 8, 16>}, {pipeline_mode = #tpu.pipeline_mode<synchronous>, transform_indices = @transform_6, window_bounds = array<i64: 8, 1>}, {transform_indices = @transform_7, window_bounds = array<i64: 1, 8, 256>}]} {
    %c0 = arith.constant 0 : index
    %c0_0 = arith.constant 0 : index
    %0 = vector.load %arg1[%c0, %c0_0] : memref<128x16xf32, #tpu.memory_space<vmem>>, vector<128x16xf32>
    %c0_1 = arith.constant 0 : index
    %c0_2 = arith.constant 0 : index
    %1 = vector.load %arg2[%c0_1, %c0_2] : memref<16x32xf32, #tpu.memory_space<vmem>>, vector<16x32xf32>
    %cst = arith.constant dense<0.000000e+00> : vector<128x32xf32>
    %2 = tpu.matmul %0, %1, %cst {dimension_numbers = #tpu.dot_dimension_numbers<[1], [0], [0], [1], [0, 0, 1, 1], [], []>} : vector<128x16xf32>, vector<16x32xf32>, vector<128x32xf32> -> vector<128x32xf32>
    %c0_3 = arith.constant 0 : index
    %c0_4 = arith.constant 0 : index
    %3 = vector.load %arg3[%c0_3, %c0_4] : memref<1x32xf32, #tpu.memory_space<vmem>>, vector<1x32xf32>
    %4 = vector.broadcast %3 : vector<1x32xf32> to vector<128x32xf32>
    %5 = arith.addf %2, %4 : vector<128x32xf32>
    %cst_5 = arith.constant 0.000000e+00 : f32
    %6 = vector.broadcast %cst_5 : f32 to vector<128x32xf32>
    %7 = arith.maximumf %5, %6 : vector<128x32xf32>
    %8 = vector.extract_strided_slice %7 {offsets = [0, 0], sizes = [16, 32], strides = [1, 1]} : vector<128x32xf32> to vector<16x32xf32>
    %c0_6 = arith.constant 0 : index
    %c0_7 = arith.constant 0 : index
    %9 = vector.load %arg9[%c0_6, %c0_7] : memref<16x256xf32, #tpu.memory_space<vmem>>, vector<16x32xf32>
    tpu.vector_store %arg9[%c0_6, %c0_7], %8 {strides = array<i32>} : memref<16x256xf32, #tpu.memory_space<vmem>>, vector<16x32xf32>,
    %10 = vector.extract_strided_slice %7 {offsets = [16, 0], sizes = [16, 32], strides = [1, 1]} : vector<128x32xf32> to vector<16x32xf32>
    %c0_8 = arith.constant 0 : index
    %c32 = arith.constant 32 : index
    %11 = vector.load %arg9[%c0_8, %c32] : memref<16x256xf32, #tpu.memory_space<vmem>>, vector<16x32xf32>
    tpu.vector_store %arg9[%c0_8, %c32], %10 {strides = array<i32>} : memref<16x256xf32, #tpu.memory_space<vmem>>, vector<16x32xf32>,
    %12 = vector.extract_strided_slice %7 {offsets = [32, 0], sizes = [16, 32], strides = [1, 1]} : vector<128x32xf32> to vector<16x32xf32>
    %c0_9 = arith.constant 0 : index
    %c64 = arith.constant 64 : index
    %13 = vector.load %arg9[%c0_9, %c64] : memref<16x256xf32, #tpu.memory_space<vmem>>, vector<16x32xf32>
    tpu.vector_store %arg9[%c0_9, %c64], %12 {strides = array<i32>} : memref<16x256xf32, #tpu.memory_space<vmem>>, vector<16x32xf32>,
    %14 = vector.extract_strided_slice %7 {offsets = [48, 0], sizes = [16, 32], strides = [1, 1]} : vector<128x32xf32> to vector<16x32xf32>
    %c0_10 = arith.constant 0 : index
    %c96 = arith.constant 96 : index
    %15 = vector.load %arg9[%c0_10, %c96] : memref<16x256xf32, #tpu.memory_space<vmem>>, vector<16x32xf32>
    tpu.vector_store %arg9[%c0_10, %c96], %14 {strides = array<i32>} : memref<16x256xf32, #tpu.memory_space<vmem>>, vector<16x32xf32>,
    %16 = vector.extract_strided_slice %7 {offsets = [64, 0], sizes = [16, 32], strides = [1, 1]} : vector<128x32xf32> to vector<16x32xf32>
    %c0_11 = arith.constant 0 : index
    %c128 = arith.constant 128 : index
    %17 = vector.load %arg9[%c0_11, %c128] : memref<16x256xf32, #tpu.memory_space<vmem>>, vector<16x32xf32>
    tpu.vector_store %arg9[%c0_11, %c128], %16 {strides = array<i32>} : memref<16x256xf32, #tpu.memory_space<vmem>>, vector<16x32xf32>,
    %18 = vector.extract_strided_slice %7 {offsets = [80, 0], sizes = [16, 32], strides = [1, 1]} : vector<128x32xf32> to vector<16x32xf32>
    %c0_12 = arith.constant 0 : index
    %c160 = arith.constant 160 : index
    %19 = vector.load %arg9[%c0_12, %c160] : memref<16x256xf32, #tpu.memory_space<vmem>>, vector<16x32xf32>
    tpu.vector_store %arg9[%c0_12, %c160], %18 {strides = array<i32>} : memref<16x256xf32, #tpu.memory_space<vmem>>, vector<16x32xf32>,
    %20 = vector.extract_strided_slice %7 {offsets = [96, 0], sizes = [16, 32], strides = [1, 1]} : vector<128x32xf32> to vector<16x32xf32>
    %c0_13 = arith.constant 0 : index
    %c192 = arith.constant 192 : index
    %21 = vector.load %arg9[%c0_13, %c192] : memref<16x256xf32, #tpu.memory_space<vmem>>, vector<16x32xf32>
    tpu.vector_store %arg9[%c0_13, %c192], %20 {strides = array<i32>} : memref<16x256xf32, #tpu.memory_space<vmem>>, vector<16x32xf32>,
    %22 = vector.extract_strided_slice %7 {offsets = [112, 0], sizes = [16, 32], strides = [1, 1]} : vector<128x32xf32> to vector<16x32xf32>
    %c0_14 = arith.constant 0 : index
    %c224 = arith.constant 224 : index
    %23 = vector.load %arg9[%c0_14, %c224] : memref<16x256xf32, #tpu.memory_space<vmem>>, vector<16x32xf32>
    tpu.vector_store %arg9[%c0_14, %c224], %22 {strides = array<i32>} : memref<16x256xf32, #tpu.memory_space<vmem>>, vector<16x32xf32>,
    %c0_15 = arith.constant 0 : index
    %c0_16 = arith.constant 0 : index
    %24 = vector.load %arg9[%c0_15, %c0_16] : memref<16x256xf32, #tpu.memory_space<vmem>>, vector<16x256xf32>
    %c0_17 = arith.constant 0 : index
    %c0_18 = arith.constant 0 : index
    %25 = vector.load %arg4[%c0_17, %c0_18] : memref<16x16xf32, #tpu.memory_space<vmem>>, vector<16x16xf32>
    %cst_19 = arith.constant dense<0.000000e+00> : vector<16x256xf32>
    %26 = tpu.matmul %25, %24, %cst_19 {dimension_numbers = #tpu.dot_dimension_numbers<[1], [0], [0], [1], [0, 0, 1, 1], [], []>} : vector<16x16xf32>, vector<16x256xf32>, vector<16x256xf32> -> vector<16x256xf32>
    %c0_20 = arith.constant 0 : index
    %c0_21 = arith.constant 0 : index
    %27 = vector.load %arg5[%c0_20, %c0_21] : memref<16x1xf32, #tpu.memory_space<vmem>>, vector<16x1xf32>
    %28 = vector.broadcast %27 : vector<16x1xf32> to vector<16x256xf32>
    %29 = arith.addf %26, %28 : vector<16x256xf32>
    %cst_22 = arith.constant 0.000000e+00 : f32
    %30 = vector.broadcast %cst_22 : f32 to vector<16x256xf32>
    %31 = arith.maximumf %29, %30 : vector<16x256xf32>
    %c0_23 = arith.constant 0 : index
    %c0_24 = arith.constant 0 : index
    %32 = vector.load %arg6[%c0_23, %c0_24] : memref<8x16xf32, #tpu.memory_space<vmem>>, vector<8x16xf32>
    %cst_25 = arith.constant dense<0.000000e+00> : vector<8x256xf32>
    %33 = tpu.matmul %32, %31, %cst_25 {dimension_numbers = #tpu.dot_dimension_numbers<[1], [0], [0], [1], [0, 0, 1, 1], [], []>} : vector<8x16xf32>, vector<16x256xf32>, vector<8x256xf32> -> vector<8x256xf32>
    %c0_26 = arith.constant 0 : index
    %c0_27 = arith.constant 0 : index
    %34 = vector.load %arg7[%c0_26, %c0_27] : memref<8x1xf32, #tpu.memory_space<vmem>>, vector<8x1xf32>
    %35 = vector.broadcast %34 : vector<8x1xf32> to vector<8x256xf32>
    %36 = arith.addf %33, %35 : vector<8x256xf32>
    %c0_28 = arith.constant 0 : index
    %c0_29 = arith.constant 0 : index
    %c0_30 = arith.constant 0 : index
    %37 = vector.load %arg8[%c0_28, %c0_29, %c0_30] : memref<1x8x256xf32, #tpu.memory_space<vmem>>, vector<1x8x256xf32>
    %38 = vector.shape_cast %37 : vector<1x8x256xf32> to vector<8x256xf32>
    %39 = vector.shape_cast %36 : vector<8x256xf32> to vector<1x8x256xf32>
    tpu.vector_store %arg8[%c0_28, %c0_29, %c0_30], %39 {strides = array<i32>} : memref<1x8x256xf32, #tpu.memory_space<vmem>>, vector<1x8x256xf32>,
    return
  }
  func.func @transform_0(%arg0: i32) -> (i32, i32) {
    %c0_i32 = arith.constant 0 : i32
    %c0_i32_0 = arith.constant 0 : i32
    return %arg0, %c0_i32 : i32, i32
  }
  func.func @transform_1(%arg0: i32) -> (i32, i32) {
    %c0_i32 = arith.constant 0 : i32
    %c0_i32_0 = arith.constant 0 : i32
    %c0_i32_1 = arith.constant 0 : i32
    return %c0_i32, %c0_i32_0 : i32, i32
  }
  func.func @transform_2(%arg0: i32) -> (i32, i32) {
    %c0_i32 = arith.constant 0 : i32
    %c0_i32_0 = arith.constant 0 : i32
    %c0_i32_1 = arith.constant 0 : i32
    return %c0_i32, %c0_i32_0 : i32, i32
  }
  func.func @transform_3(%arg0: i32) -> (i32, i32) {
    %c0_i32 = arith.constant 0 : i32
    %c0_i32_0 = arith.constant 0 : i32
    %c0_i32_1 = arith.constant 0 : i32
    return %c0_i32, %c0_i32_0 : i32, i32
  }
  func.func @transform_4(%arg0: i32) -> (i32, i32) {
    %c0_i32 = arith.constant 0 : i32
    %c0_i32_0 = arith.constant 0 : i32
    %c0_i32_1 = arith.constant 0 : i32
    return %c0_i32, %c0_i32_0 : i32, i32
  }
  func.func @transform_5(%arg0: i32) -> (i32, i32) {
    %c0_i32 = arith.constant 0 : i32
    %c0_i32_0 = arith.constant 0 : i32
    %c0_i32_1 = arith.constant 0 : i32
    return %c0_i32, %c0_i32_0 : i32, i32
  }
  func.func @transform_6(%arg0: i32) -> (i32, i32) {
    %c0_i32 = arith.constant 0 : i32
    %c0_i32_0 = arith.constant 0 : i32
    %c0_i32_1 = arith.constant 0 : i32
    return %c0_i32, %c0_i32_0 : i32, i32
  }
  func.func @transform_7(%arg0: i32) -> (i32, i32, i32) {
    %c0_i32 = arith.constant 0 : i32
    %c0_i32_0 = arith.constant 0 : i32
    %c0_i32_1 = arith.constant 0 : i32
    return %arg0, %c0_i32, %c0_i32_0 : i32, i32, i32
  }
}

</mosaic_0001>

<llo_original>
// kernel: tpu_custom_call.1
$region0: #{tpu_custom_call.1}
  #allocation0 [shape = 'u32[]', space=smem, size = 0x4, offset = 0x4, fixed_abs, tag = 'smem constant byte address 0x4 - core index']
  #allocation1 [shape = 'u32[144,128]{1,0:T(1,128)}', space=vmem, size = 0x12000, scoped, tag = 'internal scratch']
  #allocation2 [shape = 'f32[16,256]{1,0:T(8,128)}', space=vmem, size = 0x4000, scoped, tag = 'scratch operand']
  %s0 = inlined_call_operand.vmem [shape: f32[256,16], index: 0, kind: input, shape index: {}]
  %s1 = inlined_call_operand.vmem [shape: f32[16,32], index: 1, kind: input, shape index: {}]
  %s2 = inlined_call_operand.vmem [shape: f32[1,32], index: 2, kind: input, shape index: {}]
  %s3 = inlined_call_operand.vmem [shape: f32[16,16], index: 3, kind: input, shape index: {}]
  %s4 = inlined_call_operand.vmem [shape: f32[16,1], index: 4, kind: input, shape index: {}]
  %s5 = inlined_call_operand.vmem [shape: f32[8,16], index: 5, kind: input, shape index: {}]
  %s6 = inlined_call_operand.vmem [shape: f32[8,1], index: 6, kind: input, shape index: {}]
  %s7 = inlined_call_operand.hbm [shape: f32[2,8,256], index: 7, kind: output, shape index: {}]
  %s8 = sld [smem:[#allocation0]]
  $region61: #{tpu_custom_call.1} parent=0
    _
  %s10 = ssub.s32 1, %s8
  %s11 = scalar_select 0, %s10, %s8
  $region1: #{tpu_custom_call.1} parent=0
    #allocation3 [shape = 'u8[16384]{0}', space=vmem, size = 0x4000, scoped, tag = 'output window, operand 0']
    #allocation4 [shape = 's32[2]{0}', space=sflag, size = 0x8, scoped, tag = 'scoped memory for tpu_custom_call.1']
    %12 = vsyncpa [#allocation4], 0
    %s13 = scalar_lea.sflag [#allocation4], 1
    %14 = vsyncpa %s13, 0
    loop: start=0, step=1, limit=4
    $region2: #{tpu_custom_call.1} parent=1 // loop_pre_header
      _
    $region3: #{tpu_custom_call.1} parent=1 // loop_header
      %s16 = sphi 0, %s20
      %p17 = scmp.ge.s32.totalorder %s16, 4
      %s26 = sphi 0, %s28
      %s29 = sphi 0, %s26
      %s30 = sphi 0, %s29
      %s46 = sphi 0, %s30
      %s50 = sphi 0, %s50
      %s52 = sphi 0, %s50
      %s53 = sphi 0, %s52
      %s67 = sphi 0, %s53
      %s71 = sphi 0, %s71
      %s73 = sphi 0, %s71
      %s74 = sphi 0, %s73
      %s88 = sphi 0, %s74
      %s92 = sphi 0, %s92
      %s94 = sphi 0, %s92
      %s95 = sphi 0, %s94
      %s109 = sphi 0, %s95
      %s113 = sphi 0, %s113
      %s115 = sphi 0, %s113
      %s116 = sphi 0, %s115
      %s130 = sphi 0, %s116
      %s134 = sphi 0, %s134
      %s136 = sphi 0, %s134
      %s137 = sphi 0, %s136
      %s151 = sphi 0, %s137
      %s155 = sphi 0, %s155
      %s157 = sphi 0, %s155
      %s158 = sphi 0, %s157
      %s172 = sphi 0, %s158
      %s178 = sphi 0, %s180
      %s181 = sphi 0, %s178
      %s182 = sphi 0, %s181
      %s198 = sphi 0, %s182
    $region4: #{tpu_custom_call.1} parent=1 // loop_header_branch
      %19 = sbr.rel (%p17) target = $region8
    $region5: #{tpu_custom_call.1} parent=1 // loop_body
      %s21 = ssub.s32 %s16, 1
      %s22 = ssub.s32 %s16, 2
      %s23 = sadd.s32 %s16, 1
      %s24 = ssub.s32 %s16, %s23
      %p25 = scmp.eq.s32.totalorder %s24, 0
      %s27 = sadd.s32 %s26, 1
      %s28 = scalar_select %p25, %s26, %s27
      %p31 = pneg %p25
      %p32 = scmp.eq.s32.totalorder %s16, 1
      %p33 = por %p31, %p32
      %p34 = scmp.ne.s32.totalorder %s26, %s29
      %p35 = scmp.eq.s32.totalorder %s16, 0
      %p36 = por %p34, %p35
      %p37 = scmp.ne.s32.totalorder %s26, %s29
      %p38 = scmp.eq.s32.totalorder %s21, 1
      %p39 = por %p37, %p38
      %p40 = scmp.ne.s32.totalorder %s29, %s30
      %p41 = scmp.eq.s32.totalorder %s21, 0
      %p42 = por %p40, %p41
      %p43 = scmp.ne.s32.totalorder %s29, %s30
      %p44 = scmp.eq.s32.totalorder %s22, 1
      %p45 = por %p43, %p44
      %p47 = scmp.ne.s32.totalorder %s30, %s46
      %p48 = scmp.eq.s32.totalorder %s22, 0
      %p49 = por %p47, %p48
      %s51 = sadd.s32 %s50, 1
      %p54 = scmp.eq.s32.totalorder %s16, 1
      %p55 = scmp.ne.s32.totalorder %s50, %s52
      %p56 = scmp.eq.s32.totalorder %s16, 0
      %p57 = por %p55, %p56
      %p58 = scmp.ne.s32.totalorder %s50, %s52
      %p59 = scmp.eq.s32.totalorder %s21, 1
      %p60 = por %p58, %p59
      %p61 = scmp.ne.s32.totalorder %s52, %s53
      %p62 = scmp.eq.s32.totalorder %s21, 0
      %p63 = por %p61, %p62
      %p64 = scmp.ne.s32.totalorder %s52, %s53
      %p65 = scmp.eq.s32.totalorder %s22, 1
      %p66 = por %p64, %p65
      %p68 = scmp.ne.s32.totalorder %s53, %s67
      %p69 = scmp.eq.s32.totalorder %s22, 0
      %p70 = por %p68, %p69
      %s72 = sadd.s32 %s71, 1
      %p75 = scmp.eq.s32.totalorder %s16, 1
      %p76 = scmp.ne.s32.totalorder %s71, %s73
      %p77 = scmp.eq.s32.totalorder %s16, 0
      %p78 = por %p76, %p77
      %p79 = scmp.ne.s32.totalorder %s71, %s73
      %p80 = scmp.eq.s32.totalorder %s21, 1
      %p81 = por %p79, %p80
      %p82 = scmp.ne.s32.totalorder %s73, %s74
      %p83 = scmp.eq.s32.totalorder %s21, 0
      %p84 = por %p82, %p83
      %p85 = scmp.ne.s32.totalorder %s73, %s74
      %p86 = scmp.eq.s32.totalorder %s22, 1
      %p87 = por %p85, %p86
      %p89 = scmp.ne.s32.totalorder %s74, %s88
      %p90 = scmp.eq.s32.totalorder %s22, 0
      %p91 = por %p89, %p90
      %s93 = sadd.s32 %s92, 1
      %p96 = scmp.eq.s32.totalorder %s16, 1
      %p97 = scmp.ne.s32.totalorder %s92, %s94
      %p98 = scmp.eq.s32.totalorder %s16, 0
      %p99 = por %p97, %p98
      %p100 = scmp.ne.s32.totalorder %s92, %s94
      %p101 = scmp.eq.s32.totalorder %s21, 1
      %p102 = por %p100, %p101
      %p103 = scmp.ne.s32.totalorder %s94, %s95
      %p104 = scmp.eq.s32.totalorder %s21, 0
      %p105 = por %p103, %p104
      %p106 = scmp.ne.s32.totalorder %s94, %s95
      %p107 = scmp.eq.s32.totalorder %s22, 1
      %p108 = por %p106, %p107
      %p110 = scmp.ne.s32.totalorder %s95, %s109
      %p111 = scmp.eq.s32.totalorder %s22, 0
      %p112 = por %p110, %p111
      %s114 = sadd.s32 %s113, 1
      %p117 = scmp.eq.s32.totalorder %s16, 1
      %p118 = scmp.ne.s32.totalorder %s113, %s115
      %p119 = scmp.eq.s32.totalorder %s16, 0
      %p120 = por %p118, %p119
      %p121 = scmp.ne.s32.totalorder %s113, %s115
      %p122 = scmp.eq.s32.totalorder %s21, 1
      %p123 = por %p121, %p122
      %p124 = scmp.ne.s32.totalorder %s115, %s116
      %p125 = scmp.eq.s32.totalorder %s21, 0
      %p126 = por %p124, %p125
      %p127 = scmp.ne.s32.totalorder %s115, %s116
      %p128 = scmp.eq.s32.totalorder %s22, 1
      %p129 = por %p127, %p128
      %p131 = scmp.ne.s32.totalorder %s116, %s130
      %p132 = scmp.eq.s32.totalorder %s22, 0
      %p133 = por %p131, %p132
      %s135 = sadd.s32 %s134, 1
      %p138 = scmp.eq.s32.totalorder %s16, 1
      %p139 = scmp.ne.s32.totalorder %s134, %s136
      %p140 = scmp.eq.s32.totalorder %s16, 0
      %p141 = por %p139, %p140
      %p142 = scmp.ne.s32.totalorder %s134, %s136
      %p143 = scmp.eq.s32.totalorder %s21, 1
      %p144 = por %p142, %p143
      %p145 = scmp.ne.s32.totalorder %s136, %s137
      %p146 = scmp.eq.s32.totalorder %s21, 0
      %p147 = por %p145, %p146
      %p148 = scmp.ne.s32.totalorder %s136, %s137
      %p149 = scmp.eq.s32.totalorder %s22, 1
      %p150 = por %p148, %p149
      %p152 = scmp.ne.s32.totalorder %s137, %s151
      %p153 = scmp.eq.s32.totalorder %s22, 0
      %p154 = por %p152, %p153
      %s156 = sadd.s32 %s155, 1
      %p159 = scmp.eq.s32.totalorder %s16, 1
      %p160 = scmp.ne.s32.totalorder %s155, %s157
      %p161 = scmp.eq.s32.totalorder %s16, 0
      %p162 = por %p160, %p161
      %p163 = scmp.ne.s32.totalorder %s155, %s157
      %p164 = scmp.eq.s32.totalorder %s21, 1
      %p165 = por %p163, %p164
      %p166 = scmp.ne.s32.totalorder %s157, %s158
      %p167 = scmp.eq.s32.totalorder %s21, 0
      %p168 = por %p166, %p167
      %p169 = scmp.ne.s32.totalorder %s157, %s158
      %p170 = scmp.eq.s32.totalorder %s22, 1
      %p171 = por %p169, %p170
      %p173 = scmp.ne.s32.totalorder %s158, %s172
      %p174 = scmp.eq.s32.totalorder %s22, 0
      %p175 = por %p173, %p174
      %s176 = ssub.s32 %s16, %s23
      %p177 = scmp.eq.s32.totalorder %s176, 0
      %s179 = sadd.s32 %s178, 1
      %s180 = scalar_select %p177, %s178, %s179
      %p183 = pneg %p177
      %p184 = scmp.eq.s32.totalorder %s16, 1
      %p185 = por %p183, %p184
      %p186 = scmp.ne.s32.totalorder %s178, %s181
      %p187 = scmp.eq.s32.totalorder %s16, 0
      %p188 = por %p186, %p187
      %p189 = scmp.ne.s32.totalorder %s178, %s181
      %p190 = scmp.eq.s32.totalorder %s21, 1
      %p191 = por %p189, %p190
      %p192 = scmp.ne.s32.totalorder %s181, %s182
      %p193 = scmp.eq.s32.totalorder %s21, 0
      %p194 = por %p192, %p193
      %p195 = scmp.ne.s32.totalorder %s181, %s182
      %p196 = scmp.eq.s32.totalorder %s22, 1
      %p197 = por %p195, %p196
      %p199 = scmp.ne.s32.totalorder %s182, %s198
      %p200 = scmp.eq.s32.totalorder %s22, 0
      %p201 = por %p199, %p200
      %p202 = scmp.le.s32.totalorder 1, %s16
      %p203 = scmp.lt.s32.totalorder %s16, 3
      %p204 = pnand %p202, %p203
      %p205 = pneg %p204
      // Predicated region
      $region9: #{tpu_custom_call.1} parent=5 // pred_check
        _
      $region10: #{tpu_custom_call.1} parent=5 // pred_check_branch
        %207 = sbr.rel (%p204) target = $region12
      $region11: #{tpu_custom_call.1} parent=5 // pred_region
        %s208 = ssub.s32 %s16, 1
        // Predicated region
        $region13: #{tpu_custom_call.1} parent=11 // pred_check
          %p209 = pneg %p63
        $region14: #{tpu_custom_call.1} parent=11 // pred_check_branch
          %211 = sbr.rel (%p209) target = $region16
        $region15: #{tpu_custom_call.1} parent=11 // pred_region
          _
        $region16: #{tpu_custom_call.1} parent=11 // pred_fallthru
          _
        // Predicated region
        $region17: #{tpu_custom_call.1} parent=11 // pred_check
          %p212 = pneg %p84
        $region18: #{tpu_custom_call.1} parent=11 // pred_check_branch
          %214 = sbr.rel (%p212) target = $region20
        $region19: #{tpu_custom_call.1} parent=11 // pred_region
          _
        $region20: #{tpu_custom_call.1} parent=11 // pred_fallthru
          _
        // Predicated region
        $region21: #{tpu_custom_call.1} parent=11 // pred_check
          %p215 = pneg %p105
        $region22: #{tpu_custom_call.1} parent=11 // pred_check_branch
          %217 = sbr.rel (%p215) target = $region24
        $region23: #{tpu_custom_call.1} parent=11 // pred_region
          _
        $region24: #{tpu_custom_call.1} parent=11 // pred_fallthru
          _
        // Predicated region
        $region25: #{tpu_custom_call.1} parent=11 // pred_check
          %p218 = pneg %p126
        $region26: #{tpu_custom_call.1} parent=11 // pred_check_branch
          %220 = sbr.rel (%p218) target = $region28
        $region27: #{tpu_custom_call.1} parent=11 // pred_region
          _
        $region28: #{tpu_custom_call.1} parent=11 // pred_fallthru
          _
        // Predicated region
        $region29: #{tpu_custom_call.1} parent=11 // pred_check
          %p221 = pneg %p147
        $region30: #{tpu_custom_call.1} parent=11 // pred_check_branch
          %223 = sbr.rel (%p221) target = $region32
        $region31: #{tpu_custom_call.1} parent=11 // pred_region
          _
        $region32: #{tpu_custom_call.1} parent=11 // pred_fallthru
          _
        // Predicated region
        $region33: #{tpu_custom_call.1} parent=11 // pred_check
          %p224 = pneg %p168
        $region34: #{tpu_custom_call.1} parent=11 // pred_check_branch
          %226 = sbr.rel (%p224) target = $region36
        $region35: #{tpu_custom_call.1} parent=11 // pred_region
          _
        $region36: #{tpu_custom_call.1} parent=11 // pred_fallthru
          _
      $region12: #{tpu_custom_call.1} parent=5 // pred_fallthru
        _
      %p227 = scmp.lt.s32.totalorder %s16, 2
      // Predicated region
      $region37: #{tpu_custom_call.1} parent=5 // pred_check
        %p228 = pneg %p227
      $region38: #{tpu_custom_call.1} parent=5 // pred_check_branch
        %230 = sbr.rel (%p228) target = $region40
      $region39: #{tpu_custom_call.1} parent=5 // pred_region
        // Predicated region
        $region41: #{tpu_custom_call.1} parent=39 // pred_check
          %p231 = pneg %p36
        $region42: #{tpu_custom_call.1} parent=39 // pred_check_branch
          %233 = sbr.rel (%p231) target = $region44
        $region43: #{tpu_custom_call.1} parent=39 // pred_region
          %s234 = smul.u32 16, %s16
          %p235 = scmp.lt.s32.totalorder %s234, 31
          %s236 = scalar_select %p235, %s234, 31
          %s237 = smul.addr %s236, 8
          %s238 = scalar_lea.vmem %s0, %s237
          %s239 = smul.u32 16, %s16
        $region44: #{tpu_custom_call.1} parent=39 // pred_fallthru
          _
      $region40: #{tpu_custom_call.1} parent=5 // pred_fallthru
        _
      %p240 = scmp.le.s32.totalorder 1, %s16
      %p241 = scmp.lt.s32.totalorder %s16, 3
      %p242 = pnand %p240, %p241
      %p243 = pneg %p242
      // Predicated region
      $region45: #{tpu_custom_call.1} parent=5 // pred_check
        _
      $region46: #{tpu_custom_call.1} parent=5 // pred_check_branch
        %245 = sbr.rel (%p242) target = $region48
      $region47: #{tpu_custom_call.1} parent=5 // pred_region
        %s246 = ssub.s32 %s16, 1
        %s247 = smul.u32 16, %s21
        %p248 = scmp.lt.s32.totalorder %s247, 31
        %s249 = scalar_select %p248, %s247, 31
        %s250 = smul.addr %s249, 8
        %s251 = scalar_lea.vmem %s0, %s250
        %p252 = pneg %p42
        %p253 = pneg %p39
        %p254 = pneg %p63
        %p255 = pneg %p60
        %p256 = pneg %p84
        %p257 = pneg %p81
        %p258 = pneg %p105
        %p259 = pneg %p102
        %p260 = pneg %p126
        %p261 = pneg %p123
        %p262 = pneg %p147
        %p263 = pneg %p144
        %p264 = pneg %p168
        %p265 = pneg %p165
        %p266 = pneg %p194
        %p267 = pneg %p191
        %s268 = sand.u32 %s181, 1
        %s269 = scalar_lea.sflag [#allocation4], %s268
        %s270 = sand.u32 %s181, 1
        %s271 = smul.addr %s270, 16
        %s272 = scalar_lea.vmem [#allocation3], %s271
        %s273 = smul.u32 16, %s21
        %p274 = scmp.lt.s32.totalorder %s273, 31
        %s275 = scalar_select %p274, %s273, 31
        %s276 = smul.addr %s275, 8
        %s277 = scalar_lea.vmem %s0, %s276
        %s278 = smul.u32 16, %s21
        %v279 = vld [vmem:[%s277] sm:$0xff]
        %v280 = vld [vmem:[%s277 + $0x8] sm:$0xff]
        %v281 = vld [vmem:[%s277 + $0x10] sm:$0xff]
        %v282 = vld [vmem:[%s277 + $0x18] sm:$0xff]
        %v283 = vld [vmem:[%s277 + $0x20] sm:$0xff]
        %v284 = vld [vmem:[%s277 + $0x28] sm:$0xff]
        %v285 = vld [vmem:[%s277 + $0x30] sm:$0xff]
        %v286 = vld [vmem:[%s277 + $0x38] sm:$0xff]
        %v287 = vld [vmem:[%s277 + $0x40] sm:$0xff]
        %v288 = vld [vmem:[%s277 + $0x48] sm:$0xff]
        %v289 = vld [vmem:[%s277 + $0x50] sm:$0xff]
        %v290 = vld [vmem:[%s277 + $0x58] sm:$0xff]
        %v291 = vld [vmem:[%s277 + $0x60] sm:$0xff]
        %v292 = vld [vmem:[%s277 + $0x68] sm:$0xff]
        %v293 = vld [vmem:[%s277 + $0x70] sm:$0xff]
        %v294 = vld [vmem:[%s277 + $0x78] sm:$0xff]
        %v295 = vld [vmem:[%s1] sm:$0xff]
        %v296 = vld [vmem:[%s1 + $0x8] sm:$0xff]
        %v297 = vld [vmem:[%s2] sm:$0x1]
        %v299 = vlaneseq
        %v300 = vshrl.u32 %v299, 7
        %v301 = vsub.s32 0, %v300
        %v302 = vrot.slane %v297, %v301
        %vm304 = vcmask 130048
        %v306 = vsel %vm304, %v279, 0
        %v309 = vsel %vm304, %v280, 0
        %v312 = vsel %vm304, %v281, 0
        %v315 = vsel %vm304, %v282, 0
        %v318 = vsel %vm304, %v283, 0
        %v321 = vsel %vm304, %v284, 0
        %v324 = vsel %vm304, %v285, 0
        %v327 = vsel %vm304, %v286, 0
        %v330 = vsel %vm304, %v287, 0
        %v333 = vsel %vm304, %v288, 0
        %v336 = vsel %vm304, %v289, 0
        %v339 = vsel %vm304, %v290, 0
        %v342 = vsel %vm304, %v291, 0
        %v345 = vsel %vm304, %v292, 0
        %v348 = vsel %vm304, %v293, 0
        %v351 = vsel %vm304, %v294, 0
        %353 = vmatprep.subr.mxu0 0.0
        %354 = vmatpush1.msra.mxu0 %v295
        %355 = vmatprep.subr.mxu0 0.0
        %356 = vmatpush1.msra.mxu0 %v296
        %357 = vmatprep.subr.mxu0 0.0
        %358 = vmatpush1.msra.mxu0 0.0
        %359 = vmatprep.subr.mxu0 0.0
        %360 = vmatpush1.msra.mxu0 0.0
        %361 = vmatprep.subr.mxu0 0.0
        %362 = vmatpush1.msra.mxu0 0.0
        %363 = vmatprep.subr.mxu0 0.0
        %364 = vmatpush1.msra.mxu0 0.0
        %365 = vmatprep.subr.mxu0 0.0
        %366 = vmatpush1.msra.mxu0 0.0
        %367 = vmatprep.subr.mxu0 0.0
        %368 = vmatpush1.msra.mxu0 0.0
        %369 = vmatprep.subr.mxu0 0.0
        %370 = vmatpush1.msra.mxu0 0.0
        %371 = vmatprep.subr.mxu0 0.0
        %372 = vmatpush1.msra.mxu0 0.0
        %373 = vmatprep.subr.mxu0 0.0
        %374 = vmatpush1.msra.mxu0 0.0
        %375 = vmatprep.subr.mxu0 0.0
        %376 = vmatpush1.msra.mxu0 0.0
        %377 = vmatprep.subr.mxu0 0.0
        %378 = vmatpush1.msra.mxu0 0.0
        %379 = vmatprep.subr.mxu0 0.0
        %380 = vmatpush1.msra.mxu0 0.0
        %381 = vmatprep.subr.mxu0 0.0
        %382 = vmatpush1.msra.mxu0 0.0
        %383 = vmatprep.subr.mxu0 0.0
        %384 = vmatpush1.msra.mxu0 0.0
        %385 = vmatprep.subr.mxu0 0.0
        %386 = vmatpush1.msra.mxu0 0.0
        %387 = vmatprep.subr.mxu0 0.0
        %388 = vmatpush1.msra.mxu0 0.0
        %389 = vmatprep.subr.mxu0 0.0
        %390 = vmatpush1.msra.mxu0 0.0
        %391 = vmatprep.subr.mxu0 0.0
        %392 = vmatpush1.msra.mxu0 0.0
        %393 = vmatprep.subr.mxu0 0.0
        %394 = vmatpush1.msra.mxu0 0.0
        %395 = vmatprep.subr.mxu0 0.0
        %396 = vmatpush1.msra.mxu0 0.0
        %397 = vmatprep.subr.mxu0 0.0
        %398 = vmatpush1.msra.mxu0 0.0
        %399 = vmatprep.subr.mxu0 0.0
        %400 = vmatpush1.msra.mxu0 0.0
        %401 = vmatprep.subr.mxu0 0.0
        %402 = vmatpush1.msra.mxu0 0.0
        %403 = vmatprep.subr.mxu0 0.0
        %404 = vmatpush1.msra.mxu0 0.0
        %405 = vmatprep.subr.mxu0 0.0
        %406 = vmatpush1.msra.mxu0 0.0
        %407 = vmatprep.subr.mxu0 0.0
        %408 = vmatpush1.msra.mxu0 0.0
        %409 = vmatprep.subr.mxu0 0.0
        %410 = vmatpush1.msra.mxu0 0.0
        %411 = vmatprep.subr.mxu0 0.0
        %412 = vmatpush1.msra.mxu0 0.0
        %413 = vmatprep.subr.mxu0 0.0
        %414 = vmatpush1.msra.mxu0 0.0
        %415 = vmatprep.subr.mxu0 0.0
        %416 = vmatpush1.msra.mxu0 0.0
        %417 = vmatprep.mubr.f32.mxu0 0.0
        %418 = vmatmul.mubr.f32.gmra.mrb[0].mxu0 %v306
        %v419 = vpop.f32.mrb[0].mxu0
        %v420 = vadd.f32 %v302, %v419
        %v421 = vpop.f32.mrb[0].mxu0
        %422 = vmatprep.mubr.f32.mxu0 0.0
        %423 = vmatmul.mubr.f32.gmra.mrb[0].mxu0 %v309
        %v424 = vpop.f32.mrb[0].mxu0
        %v425 = vadd.f32 %v302, %v424
        %v426 = vpop.f32.mrb[0].mxu0
        %427 = vmatprep.mubr.f32.mxu0 0.0
        %428 = vmatmul.mubr.f32.gmra.mrb[0].mxu0 %v312
        %v429 = vpop.f32.mrb[0].mxu0
        %v430 = vadd.f32 %v302, %v429
        %v431 = vpop.f32.mrb[0].mxu0
        %432 = vmatprep.mubr.f32.mxu0 0.0
        %433 = vmatmul.mubr.f32.gmra.mrb[0].mxu0 %v315
        %v434 = vpop.f32.mrb[0].mxu0
        %v435 = vadd.f32 %v302, %v434
        %v436 = vpop.f32.mrb[0].mxu0
        %437 = vmatprep.mubr.f32.mxu0 0.0
        %438 = vmatmul.mubr.f32.gmra.mrb[0].mxu0 %v318
        %v439 = vpop.f32.mrb[0].mxu0
        %v440 = vadd.f32 %v302, %v439
        %v441 = vpop.f32.mrb[0].mxu0
        %442 = vmatprep.mubr.f32.mxu0 0.0
        %443 = vmatmul.mubr.f32.gmra.mrb[0].mxu0 %v321
        %v444 = vpop.f32.mrb[0].mxu0
        %v445 = vadd.f32 %v302, %v444
        %v446 = vpop.f32.mrb[0].mxu0
        %447 = vmatprep.mubr.f32.mxu0 0.0
        %448 = vmatmul.mubr.f32.gmra.mrb[0].mxu0 %v324
        %v449 = vpop.f32.mrb[0].mxu0
        %v450 = vadd.f32 %v302, %v449
        %v451 = vpop.f32.mrb[0].mxu0
        %452 = vmatprep.mubr.f32.mxu0 0.0
        %453 = vmatmul.mubr.f32.gmra.mrb[0].mxu0 %v327
        %v454 = vpop.f32.mrb[0].mxu0
        %v455 = vadd.f32 %v302, %v454
        %v456 = vpop.f32.mrb[0].mxu0
        %457 = vmatprep.mubr.f32.mxu0 0.0
        %458 = vmatmul.mubr.f32.gmra.mrb[0].mxu0 %v330
        %v459 = vpop.f32.mrb[0].mxu0
        %v460 = vadd.f32 %v302, %v459
        %v461 = vpop.f32.mrb[0].mxu0
        %462 = vmatprep.mubr.f32.mxu0 0.0
        %463 = vmatmul.mubr.f32.gmra.mrb[0].mxu0 %v333
        %v464 = vpop.f32.mrb[0].mxu0
        %v465 = vadd.f32 %v302, %v464
        %v466 = vpop.f32.mrb[0].mxu0
        %467 = vmatprep.mubr.f32.mxu0 0.0
        %468 = vmatmul.mubr.f32.gmra.mrb[0].mxu0 %v336
        %v469 = vpop.f32.mrb[0].mxu0
        %v470 = vadd.f32 %v302, %v469
        %v471 = vpop.f32.mrb[0].mxu0
        %472 = vmatprep.mubr.f32.mxu0 0.0
        %473 = vmatmul.mubr.f32.gmra.mrb[0].mxu0 %v339
        %v474 = vpop.f32.mrb[0].mxu0
        %v475 = vadd.f32 %v302, %v474
        %v476 = vpop.f32.mrb[0].mxu0
        %477 = vmatprep.mubr.f32.mxu0 0.0
        %478 = vmatmul.mubr.f32.gmra.mrb[0].mxu0 %v342
        %v479 = vpop.f32.mrb[0].mxu0
        %v480 = vadd.f32 %v302, %v479
        %v481 = vpop.f32.mrb[0].mxu0
        %482 = vmatprep.mubr.f32.mxu0 0.0
        %483 = vmatmul.mubr.f32.gmra.mrb[0].mxu0 %v345
        %v484 = vpop.f32.mrb[0].mxu0
        %v485 = vadd.f32 %v302, %v484
        %v486 = vpop.f32.mrb[0].mxu0
        %487 = vmatprep.mubr.f32.mxu0 0.0
        %488 = vmatmul.mubr.f32.gmra.mrb[0].mxu0 %v348
        %v489 = vpop.f32.mrb[0].mxu0
        %v490 = vadd.f32 %v302, %v489
        %v491 = vpop.f32.mrb[0].mxu0
        %492 = vmatprep.mubr.f32.mxu0 0.0
        %493 = vmatmul.mubr.f32.gmra.mrb[0].mxu0 %v351
        %v494 = vpop.f32.mrb[0].mxu0
        %v495 = vadd.f32 %v302, %v494
        %v496 = vpop.f32.mrb[0].mxu0
        %497 = vdwg.mxu0
        %v498 = vmax.f32 %v420, 0.0
        %v499 = vmax.f32 %v425, 0.0
        %v500 = vmax.f32 %v430, 0.0
        %v501 = vmax.f32 %v435, 0.0
        %v502 = vmax.f32 %v440, 0.0
        %v503 = vmax.f32 %v445, 0.0
        %v504 = vmax.f32 %v450, 0.0
        %v505 = vmax.f32 %v455, 0.0
        %v506 = vmax.f32 %v460, 0.0
        %v507 = vmax.f32 %v465, 0.0
        %v508 = vmax.f32 %v470, 0.0
        %v509 = vmax.f32 %v475, 0.0
        %v510 = vmax.f32 %v480, 0.0
        %v511 = vmax.f32 %v485, 0.0
        %v512 = vmax.f32 %v490, 0.0
        %v513 = vmax.f32 %v495, 0.0
        %vm514 = vcmask 261120
        %515 = vst.msk [vmem:[#allocation2] sm:$0xff] %vm514, %v498
        %516 = vst.msk [vmem:[#allocation2 + $0x10] sm:$0xff] %vm514, %v499
        %519 = vrot.lane.b32.xlu0 %v500, 32
        %v520 = vpop.permute.xlu0 %519
        %521 = vrot.lane.b32.xlu0 %v501, 32
        %v522 = vpop.permute.xlu0 %521
        %vm525 = vcmask 523520
        %526 = vst.msk [vmem:[#allocation2] sm:$0xff] %vm525, %v520
        %527 = vst.msk [vmem:[#allocation2 + $0x10] sm:$0xff] %vm525, %v522
        %530 = vrot.lane.b32.xlu0 %v502, 64
        %v531 = vpop.permute.xlu0 %530
        %532 = vrot.lane.b32.xlu0 %v503, 64
        %v533 = vpop.permute.xlu0 %532
        %vm536 = vcmask 785920
        %537 = vst.msk [vmem:[#allocation2] sm:$0xff] %vm536, %v531
        %538 = vst.msk [vmem:[#allocation2 + $0x10] sm:$0xff] %vm536, %v533
        %541 = vrot.lane.b32.xlu0 %v504, 96
        %v542 = vpop.permute.xlu0 %541
        %543 = vrot.lane.b32.xlu0 %v505, 96
        %v544 = vpop.permute.xlu0 %543
        %vm547 = vcmask 1048320
        %548 = vst.msk [vmem:[#allocation2] sm:$0xff] %vm547, %v542
        %549 = vst.msk [vmem:[#allocation2 + $0x10] sm:$0xff] %vm547, %v544
        %550 = vst.msk [vmem:[#allocation2 + $0x8] sm:$0xff] %vm514, %v506
        %551 = vst.msk [vmem:[#allocation2 + $0x18] sm:$0xff] %vm514, %v507
        %554 = vrot.lane.b32.xlu0 %v508, 32
        %v555 = vpop.permute.xlu0 %554
        %556 = vrot.lane.b32.xlu0 %v509, 32
        %v557 = vpop.permute.xlu0 %556
        %560 = vst.msk [vmem:[#allocation2 + $0x8] sm:$0xff] %vm525, %v555
        %561 = vst.msk [vmem:[#allocation2 + $0x18] sm:$0xff] %vm525, %v557
        %564 = vrot.lane.b32.xlu0 %v510, 64
        %v565 = vpop.permute.xlu0 %564
        %566 = vrot.lane.b32.xlu0 %v511, 64
        %v567 = vpop.permute.xlu0 %566
        %570 = vst.msk [vmem:[#allocation2 + $0x8] sm:$0xff] %vm536, %v565
        %571 = vst.msk [vmem:[#allocation2 + $0x18] sm:$0xff] %vm536, %v567
        %574 = vrot.lane.b32.xlu0 %v512, 96
        %v575 = vpop.permute.xlu0 %574
        %576 = vrot.lane.b32.xlu0 %v513, 96
        %v577 = vpop.permute.xlu0 %576
        %580 = vst.msk [vmem:[#allocation2 + $0x8] sm:$0xff] %vm547, %v575
        %581 = vst.msk [vmem:[#allocation2 + $0x18] sm:$0xff] %vm547, %v577
        %v582 = vld [vmem:[#allocation2] sm:$0xff]
        %v583 = vld [vmem:[#allocation2 + $0x8] sm:$0xff]
        %v584 = vld [vmem:[#allocation2 + $0x10] sm:$0xff]
        %v585 = vld [vmem:[#allocation2 + $0x18] sm:$0xff]
        %v586 = vld [vmem:[%s3] sm:$0xff]
        %v587 = vld [vmem:[%s3 + $0x8] sm:$0xff]
        %v588 = vld [vmem:[%s4] sm:$0xff]
        %v589 = vld [vmem:[%s4 + $0x8] sm:$0xff]
        %591 = vset.pattern.permute.xlu0 0
        %592 = vperm.xlu0 %591, %v588
        %v593 = vpop.permute.xlu0 %592
        %596 = vset.pattern.permute.xlu0 0
        %597 = vperm.xlu0 %596, %v589
        %v598 = vpop.permute.xlu0 %597
        %v601 = vsel %vm304, %v586, 0
        %v604 = vsel %vm304, %v587, 0
        %606 = vmatprep.subr.mxu0 %v583
        %607 = vmatpush1.msra.mxu0 %v582
        %608 = vmatprep.subr.mxu0 %v585
        %609 = vmatpush1.msra.mxu0 %v584
        %610 = vmatprep.subr.mxu0 0.0
        %611 = vmatpush1.msra.mxu0 0.0
        %612 = vmatprep.subr.mxu0 0.0
        %613 = vmatpush1.msra.mxu0 0.0
        %614 = vmatprep.subr.mxu0 0.0
        %615 = vmatpush1.msra.mxu0 0.0
        %616 = vmatprep.subr.mxu0 0.0
        %617 = vmatpush1.msra.mxu0 0.0
        %618 = vmatprep.subr.mxu0 0.0
        %619 = vmatpush1.msra.mxu0 0.0
        %620 = vmatprep.subr.mxu0 0.0
        %621 = vmatpush1.msra.mxu0 0.0
        %622 = vmatprep.subr.mxu0 0.0
        %623 = vmatpush1.msra.mxu0 0.0
        %624 = vmatprep.subr.mxu0 0.0
        %625 = vmatpush1.msra.mxu0 0.0
        %626 = vmatprep.subr.mxu0 0.0
        %627 = vmatpush1.msra.mxu0 0.0
        %628 = vmatprep.subr.mxu0 0.0
        %629 = vmatpush1.msra.mxu0 0.0
        %630 = vmatprep.subr.mxu0 0.0
        %631 = vmatpush1.msra.mxu0 0.0
        %632 = vmatprep.subr.mxu0 0.0
        %633 = vmatpush1.msra.mxu0 0.0
        %634 = vmatprep.subr.mxu0 0.0
        %635 = vmatpush1.msra.mxu0 0.0
        %636 = vmatprep.subr.mxu0 0.0
        %637 = vmatpush1.msra.mxu0 0.0
        %638 = vmatprep.subr.mxu0 0.0
        %639 = vmatpush1.msra.mxu0 0.0
        %640 = vmatprep.subr.mxu0 0.0
        %641 = vmatpush1.msra.mxu0 0.0
        %642 = vmatprep.subr.mxu0 0.0
        %643 = vmatpush1.msra.mxu0 0.0
        %644 = vmatprep.subr.mxu0 0.0
        %645 = vmatpush1.msra.mxu0 0.0
        %646 = vmatprep.subr.mxu0 0.0
        %647 = vmatpush1.msra.mxu0 0.0
        %648 = vmatprep.subr.mxu0 0.0
        %649 = vmatpush1.msra.mxu0 0.0
        %650 = vmatprep.subr.mxu0 0.0
        %651 = vmatpush1.msra.mxu0 0.0
        %652 = vmatprep.subr.mxu0 0.0
        %653 = vmatpush1.msra.mxu0 0.0
        %654 = vmatprep.subr.mxu0 0.0
        %655 = vmatpush1.msra.mxu0 0.0
        %656 = vmatprep.subr.mxu0 0.0
        %657 = vmatpush1.msra.mxu0 0.0
        %658 = vmatprep.subr.mxu0 0.0
        %659 = vmatpush1.msra.mxu0 0.0
        %660 = vmatprep.subr.mxu0 0.0
        %661 = vmatpush1.msra.mxu0 0.0
        %662 = vmatprep.subr.mxu0 0.0
        %663 = vmatpush1.msra.mxu0 0.0
        %664 = vmatprep.subr.mxu0 0.0
        %665 = vmatpush1.msra.mxu0 0.0
        %666 = vmatprep.subr.mxu0 0.0
        %667 = vmatpush1.msra.mxu0 0.0
        %668 = vmatprep.subr.mxu0 0.0
        %669 = vmatpush1.msra.mxu0 0.0
        %670 = vmatprep.mubr.f32.mxu0 0.0
        %671 = vmatmul.mubr.f32.gmra.mrb[0].mxu0 %v601
        %v672 = vpop.f32.mrb[0].mxu0
        %v673 = vadd.f32 %v593, %v672
        %v674 = vpop.f32.mrb[0].mxu0
        %v675 = vadd.f32 %v593, %v674
        %676 = vmatprep.mubr.f32.mxu0 0.0
        %677 = vmatmul.mubr.f32.gmra.mrb[0].mxu0 %v604
        %v678 = vpop.f32.mrb[0].mxu0
        %v679 = vadd.f32 %v598, %v678
        %v680 = vpop.f32.mrb[0].mxu0
        %v681 = vadd.f32 %v598, %v680
        %682 = vdwg.mxu0
        %v683 = vmax.f32 %v673, 0.0
        %v684 = vmax.f32 %v675, 0.0
        %v685 = vmax.f32 %v679, 0.0
        %v686 = vmax.f32 %v681, 0.0
        %v687 = vld [vmem:[%s5] sm:$0xff]
        %v688 = vld [vmem:[%s6] sm:$0xff]
        %690 = vset.pattern.permute.xlu0 0
        %691 = vperm.xlu0 %690, %v688
        %v692 = vpop.permute.xlu0 %691
        %v695 = vsel %vm304, %v687, 0
        %697 = vmatprep.subr.mxu0 %v684
        %698 = vmatpush1.msra.mxu0 %v683
        %699 = vmatprep.subr.mxu0 %v686
        %700 = vmatpush1.msra.mxu0 %v685
        %701 = vmatprep.subr.mxu0 0.0
        %702 = vmatpush1.msra.mxu0 0.0
        %703 = vmatprep.subr.mxu0 0.0
        %704 = vmatpush1.msra.mxu0 0.0
        %705 = vmatprep.subr.mxu0 0.0
        %706 = vmatpush1.msra.mxu0 0.0
        %707 = vmatprep.subr.mxu0 0.0
        %708 = vmatpush1.msra.mxu0 0.0
        %709 = vmatprep.subr.mxu0 0.0
        %710 = vmatpush1.msra.mxu0 0.0
        %711 = vmatprep.subr.mxu0 0.0
        %712 = vmatpush1.msra.mxu0 0.0
        %713 = vmatprep.subr.mxu0 0.0
        %714 = vmatpush1.msra.mxu0 0.0
        %715 = vmatprep.subr.mxu0 0.0
        %716 = vmatpush1.msra.mxu0 0.0
        %717 = vmatprep.subr.mxu0 0.0
        %718 = vmatpush1.msra.mxu0 0.0
        %719 = vmatprep.subr.mxu0 0.0
        %720 = vmatpush1.msra.mxu0 0.0
        %721 = vmatprep.subr.mxu0 0.0
        %722 = vmatpush1.msra.mxu0 0.0
        %723 = vmatprep.subr.mxu0 0.0
        %724 = vmatpush1.msra.mxu0 0.0
        %725 = vmatprep.subr.mxu0 0.0
        %726 = vmatpush1.msra.mxu0 0.0
        %727 = vmatprep.subr.mxu0 0.0
        %728 = vmatpush1.msra.mxu0 0.0
        %729 = vmatprep.subr.mxu0 0.0
        %730 = vmatpush1.msra.mxu0 0.0
        %731 = vmatprep.subr.mxu0 0.0
        %732 = vmatpush1.msra.mxu0 0.0
        %733 = vmatprep.subr.mxu0 0.0
        %734 = vmatpush1.msra.mxu0 0.0
        %735 = vmatprep.subr.mxu0 0.0
        %736 = vmatpush1.msra.mxu0 0.0
        %737 = vmatprep.subr.mxu0 0.0
        %738 = vmatpush1.msra.mxu0 0.0
        %739 = vmatprep.subr.mxu0 0.0
        %740 = vmatpush1.msra.mxu0 0.0
        %741 = vmatprep.subr.mxu0 0.0
        %742 = vmatpush1.msra.mxu0 0.0
        %743 = vmatprep.subr.mxu0 0.0
        %744 = vmatpush1.msra.mxu0 0.0
        %745 = vmatprep.subr.mxu0 0.0
        %746 = vmatpush1.msra.mxu0 0.0
        %747 = vmatprep.subr.mxu0 0.0
        %748 = vmatpush1.msra.mxu0 0.0
        %749 = vmatprep.subr.mxu0 0.0
        %750 = vmatpush1.msra.mxu0 0.0
        %751 = vmatprep.subr.mxu0 0.0
        %752 = vmatpush1.msra.mxu0 0.0
        %753 = vmatprep.subr.mxu0 0.0
        %754 = vmatpush1.msra.mxu0 0.0
        %755 = vmatprep.subr.mxu0 0.0
        %756 = vmatpush1.msra.mxu0 0.0
        %757 = vmatprep.subr.mxu0 0.0
        %758 = vmatpush1.msra.mxu0 0.0
        %759 = vmatprep.subr.mxu0 0.0
        %760 = vmatpush1.msra.mxu0 0.0
        %761 = vmatprep.mubr.f32.mxu0 0.0
        %762 = vmatmul.mubr.f32.gmra.mrb[0].mxu0 %v695
        %v763 = vpop.f32.mrb[0].mxu0
        %v764 = vadd.f32 %v692, %v763
        %v765 = vpop.f32.mrb[0].mxu0
        %v766 = vadd.f32 %v692, %v765
        %767 = vdwg.mxu0
        %768 = vst [vmem:[%s272] sm:$0xff] %v764
        %769 = vst [vmem:[%s272 + $0x8] sm:$0xff] %v766
        %s770 = sand.u32 %s181, 1
        %s771 = scalar_lea.sflag [#allocation4], %s770
        %s772 = sand.u32 %s181, 1
        %s773 = smul.addr %s772, 16
        %s774 = scalar_lea.vmem [#allocation3], %s773
        // Predicated region
        $region49: #{tpu_custom_call.1} parent=47 // pred_check
          %p775 = pneg %p191
        $region50: #{tpu_custom_call.1} parent=47 // pred_check_branch
          %777 = sbr.rel (%p775) target = $region52
        $region51: #{tpu_custom_call.1} parent=47 // pred_region
          %s779 = ssub.s32 256, 256
          %780 = vsyncadd %s771, %s779
          %s781 = smul.addr %s21, 2
          %s782 = smul.addr %s781, 128
          %s783 = scalar_lea.hbm %s7, %s782
          %s785 = sshll.u32 %s774, 4
          %s786 = int_to_ptr.vmem [resolvable:$true] %s785
          %788 = dma.vmem_to_hbm [thread:$0]  %s786, 256, %s783, %s771
        $region52: #{tpu_custom_call.1} parent=47 // pred_fallthru
          _
      $region48: #{tpu_custom_call.1} parent=5 // pred_fallthru
        _
      %p789 = scmp.le.s32.totalorder 2, %s16
      // Predicated region
      $region53: #{tpu_custom_call.1} parent=5 // pred_check
        %p790 = pneg %p789
      $region54: #{tpu_custom_call.1} parent=5 // pred_check_branch
        %792 = sbr.rel (%p790) target = $region56
      $region55: #{tpu_custom_call.1} parent=5 // pred_region
        %s793 = ssub.s32 %s16, 2
        // Predicated region
        $region57: #{tpu_custom_call.1} parent=55 // pred_check
          %p794 = pneg %p197
        $region58: #{tpu_custom_call.1} parent=55 // pred_check_branch
          %796 = sbr.rel (%p794) target = $region60
        $region59: #{tpu_custom_call.1} parent=55 // pred_region
          %s797 = sand.u32 %s182, 1
          %s798 = scalar_lea.sflag [#allocation4], %s797
          %s799 = sand.u32 %s182, 1
          %s800 = smul.addr %s799, 16
          %s801 = scalar_lea.vmem [#allocation3], %s800
          %802 = dma.done %s798, 256
        $region60: #{tpu_custom_call.1} parent=55 // pred_fallthru
          _
      $region56: #{tpu_custom_call.1} parent=5 // pred_fallthru
        _
    $region6: #{tpu_custom_call.1} parent=1 // loop_footer
      %s20 = sadd.s32 1, %s16
    $region7: #{tpu_custom_call.1} parent=1 // loop_footer_branch
      %15 = sbr.rel target = $region3
    $region8: #{tpu_custom_call.1} parent=1 // loop_exit
      _
    %803 = vsyncpa [#allocation4], 1
    %s804 = scalar_lea.sflag [#allocation4], 1
    %805 = vsyncpa %s804, 1

// kernel: tpu_custom_call.1
$region0: #{tpu_custom_call.1}
  #allocation0 [shape = 'u32[]', space=smem, size = 0x4, offset = 0x4, fixed_abs, tag = 'smem constant byte address 0x4 - core index']
  #allocation1 [shape = 'u32[144,128]{1,0:T(1,128)}', space=vmem, size = 0x12000, scoped, tag = 'internal scratch']
  #allocation2 [shape = 'f32[16,256]{1,0:T(8,128)}', space=vmem, size = 0x4000, scoped, tag = 'scratch operand']
  %s0 = inlined_call_operand.vmem [shape: f32[256,16], index: 0, kind: input, shape index: {}]
  %s1 = inlined_call_operand.vmem [shape: f32[16,32], index: 1, kind: input, shape index: {}]
  %s2 = inlined_call_operand.vmem [shape: f32[1,32], index: 2, kind: input, shape index: {}]
  %s3 = inlined_call_operand.vmem [shape: f32[16,16], index: 3, kind: input, shape index: {}]
  %s4 = inlined_call_operand.vmem [shape: f32[16,1], index: 4, kind: input, shape index: {}]
  %s5 = inlined_call_operand.vmem [shape: f32[8,16], index: 5, kind: input, shape index: {}]
  %s6 = inlined_call_operand.vmem [shape: f32[8,1], index: 6, kind: input, shape index: {}]
  %s7 = inlined_call_operand.hbm [shape: f32[2,8,256], index: 7, kind: output, shape index: {}]
  %s8 = sld [smem:[#allocation0]]
  $region61: #{tpu_custom_call.1} parent=0
    _
  %s10 = ssub.s32 1, %s8
  %s11 = scalar_select 0, %s10, %s8
  $region1: #{tpu_custom_call.1} parent=0
    #allocation3 [shape = 'u8[16384]{0}', space=vmem, size = 0x4000, scoped, tag = 'output window, operand 0']
    #allocation4 [shape = 's32[2]{0}', space=sflag, size = 0x8, scoped, tag = 'scoped memory for tpu_custom_call.1']
    %12 = vsyncpa [#allocation4], 0
    %s13 = scalar_lea.sflag [#allocation4], 1
    %14 = vsyncpa %s13, 0
    loop: start=0, step=1, limit=4
    $region2: #{tpu_custom_call.1} parent=1 // loop_pre_header
      _
    $region3: #{tpu_custom_call.1} parent=1 // loop_header
      %s16 = sphi 0, %s20
      %p17 = scmp.ge.s32.totalorder %s16, 4
      %s26 = sphi 0, %s28
      %s29 = sphi 0, %s26
      %s30 = sphi 0, %s29
      %s46 = sphi 0, %s30
      %s50 = sphi 0, %s50
      %s52 = sphi 0, %s50
      %s53 = sphi 0, %s52
      %s67 = sphi 0, %s53
      %s71 = sphi 0, %s71
      %s73 = sphi 0, %s71
      %s74 = sphi 0, %s73
      %s88 = sphi 0, %s74
      %s92 = sphi 0, %s92
      %s94 = sphi 0, %s92
      %s95 = sphi 0, %s94
      %s109 = sphi 0, %s95
      %s113 = sphi 0, %s113
      %s115 = sphi 0, %s113
      %s116 = sphi 0, %s115
      %s130 = sphi 0, %s116
      %s134 = sphi 0, %s134
      %s136 = sphi 0, %s134
      %s137 = sphi 0, %s136
      %s151 = sphi 0, %s137
      %s155 = sphi 0, %s155
      %s157 = sphi 0, %s155
      %s158 = sphi 0, %s157
      %s172 = sphi 0, %s158
      %s178 = sphi 0, %s180
      %s181 = sphi 0, %s178
      %s182 = sphi 0, %s181
      %s198 = sphi 0, %s182
    $region4: #{tpu_custom_call.1} parent=1 // loop_header_branch
      %19 = sbr.rel (%p17) target = $region8
    $region5: #{tpu_custom_call.1} parent=1 // loop_body
      %s21 = ssub.s32 %s16, 1
      %s22 = ssub.s32 %s16, 2
      %s23 = sadd.s32 %s16, 1
      %s24 = ssub.s32 %s16, %s23
      %p25 = scmp.eq.s32.totalorder %s24, 0
      %s27 = sadd.s32 %s26, 1
      %s28 = scalar_select %p25, %s26, %s27
      %p31 = pneg %p25
      %p32 = scmp.eq.s32.totalorder %s16, 1
      %p33 = por %p31, %p32
      %p34 = scmp.ne.s32.totalorder %s26, %s29
      %p35 = scmp.eq.s32.totalorder %s16, 0
      %p36 = por %p34, %p35
      %p37 = scmp.ne.s32.totalorder %s26, %s29
      %p38 = scmp.eq.s32.totalorder %s21, 1
      %p39 = por %p37, %p38
      %p40 = scmp.ne.s32.totalorder %s29, %s30
      %p41 = scmp.eq.s32.totalorder %s21, 0
      %p42 = por %p40, %p41
      %p43 = scmp.ne.s32.totalorder %s29, %s30
      %p44 = scmp.eq.s32.totalorder %s22, 1
      %p45 = por %p43, %p44
      %p47 = scmp.ne.s32.totalorder %s30, %s46
      %p48 = scmp.eq.s32.totalorder %s22, 0
      %p49 = por %p47, %p48
      %s51 = sadd.s32 %s50, 1
      %p54 = scmp.eq.s32.totalorder %s16, 1
      %p55 = scmp.ne.s32.totalorder %s50, %s52
      %p56 = scmp.eq.s32.totalorder %s16, 0
      %p57 = por %p55, %p56
      %p58 = scmp.ne.s32.totalorder %s50, %s52
      %p59 = scmp.eq.s32.totalorder %s21, 1
      %p60 = por %p58, %p59
      %p61 = scmp.ne.s32.totalorder %s52, %s53
      %p62 = scmp.eq.s32.totalorder %s21, 0
      %p63 = por %p61, %p62
      %p64 = scmp.ne.s32.totalorder %s52, %s53
      %p65 = scmp.eq.s32.totalorder %s22, 1
      %p66 = por %p64, %p65
      %p68 = scmp.ne.s32.totalorder %s53, %s67
      %p69 = scmp.eq.s32.totalorder %s22, 0
      %p70 = por %p68, %p69
      %s72 = sadd.s32 %s71, 1
      %p75 = scmp.eq.s32.totalorder %s16, 1
      %p76 = scmp.ne.s32.totalorder %s71, %s73
      %p77 = scmp.eq.s32.totalorder %s16, 0
      %p78 = por %p76, %p77
      %p79 = scmp.ne.s32.totalorder %s71, %s73
      %p80 = scmp.eq.s32.totalorder %s21, 1
      %p81 = por %p79, %p80
      %p82 = scmp.ne.s32.totalorder %s73, %s74
      %p83 = scmp.eq.s32.totalorder %s21, 0
      %p84 = por %p82, %p83
      %p85 = scmp.ne.s32.totalorder %s73, %s74
      %p86 = scmp.eq.s32.totalorder %s22, 1
      %p87 = por %p85, %p86
      %p89 = scmp.ne.s32.totalorder %s74, %s88
      %p90 = scmp.eq.s32.totalorder %s22, 0
      %p91 = por %p89, %p90
      %s93 = sadd.s32 %s92, 1
      %p96 = scmp.eq.s32.totalorder %s16, 1
      %p97 = scmp.ne.s32.totalorder %s92, %s94
      %p98 = scmp.eq.s32.totalorder %s16, 0
      %p99 = por %p97, %p98
      %p100 = scmp.ne.s32.totalorder %s92, %s94
      %p101 = scmp.eq.s32.totalorder %s21, 1
      %p102 = por %p100, %p101
      %p103 = scmp.ne.s32.totalorder %s94, %s95
      %p104 = scmp.eq.s32.totalorder %s21, 0
      %p105 = por %p103, %p104
      %p106 = scmp.ne.s32.totalorder %s94, %s95
      %p107 = scmp.eq.s32.totalorder %s22, 1
      %p108 = por %p106, %p107
      %p110 = scmp.ne.s32.totalorder %s95, %s109
      %p111 = scmp.eq.s32.totalorder %s22, 0
      %p112 = por %p110, %p111
      %s114 = sadd.s32 %s113, 1
      %p117 = scmp.eq.s32.totalorder %s16, 1
      %p118 = scmp.ne.s32.totalorder %s113, %s115
      %p119 = scmp.eq.s32.totalorder %s16, 0
      %p120 = por %p118, %p119
      %p121 = scmp.ne.s32.totalorder %s113, %s115
      %p122 = scmp.eq.s32.totalorder %s21, 1
      %p123 = por %p121, %p122
      %p124 = scmp.ne.s32.totalorder %s115, %s116
      %p125 = scmp.eq.s32.totalorder %s21, 0
      %p126 = por %p124, %p125
      %p127 = scmp.ne.s32.totalorder %s115, %s116
      %p128 = scmp.eq.s32.totalorder %s22, 1
      %p129 = por %p127, %p128
      %p131 = scmp.ne.s32.totalorder %s116, %s130
      %p132 = scmp.eq.s32.totalorder %s22, 0
      %p133 = por %p131, %p132
      %s135 = sadd.s32 %s134, 1
      %p138 = scmp.eq.s32.totalorder %s16, 1
      %p139 = scmp.ne.s32.totalorder %s134, %s136
      %p140 = scmp.eq.s32.totalorder %s16, 0
      %p141 = por %p139, %p140
      %p142 = scmp.ne.s32.totalorder %s134, %s136
      %p143 = scmp.eq.s32.totalorder %s21, 1
      %p144 = por %p142, %p143
      %p145 = scmp.ne.s32.totalorder %s136, %s137
      %p146 = scmp.eq.s32.totalorder %s21, 0
      %p147 = por %p145, %p146
      %p148 = scmp.ne.s32.totalorder %s136, %s137
      %p149 = scmp.eq.s32.totalorder %s22, 1
      %p150 = por %p148, %p149
      %p152 = scmp.ne.s32.totalorder %s137, %s151
      %p153 = scmp.eq.s32.totalorder %s22, 0
      %p154 = por %p152, %p153
      %s156 = sadd.s32 %s155, 1
      %p159 = scmp.eq.s32.totalorder %s16, 1
      %p160 = scmp.ne.s32.totalorder %s155, %s157
      %p161 = scmp.eq.s32.totalorder %s16, 0
      %p162 = por %p160, %p161
      %p163 = scmp.ne.s32.totalorder %s155, %s157
      %p164 = scmp.eq.s32.totalorder %s21, 1
      %p165 = por %p163, %p164
      %p166 = scmp.ne.s32.totalorder %s157, %s158
      %p167 = scmp.eq.s32.totalorder %s21, 0
      %p168 = por %p166, %p167
      %p169 = scmp.ne.s32.totalorder %s157, %s158
      %p170 = scmp.eq.s32.totalorder %s22, 1
      %p171 = por %p169, %p170
      %p173 = scmp.ne.s32.totalorder %s158, %s172
      %p174 = scmp.eq.s32.totalorder %s22, 0
      %p175 = por %p173, %p174
      %s176 = ssub.s32 %s16, %s23
      %p177 = scmp.eq.s32.totalorder %s176, 0
      %s179 = sadd.s32 %s178, 1
      %s180 = scalar_select %p177, %s178, %s179
      %p183 = pneg %p177
      %p184 = scmp.eq.s32.totalorder %s16, 1
      %p185 = por %p183, %p184
      %p186 = scmp.ne.s32.totalorder %s178, %s181
      %p187 = scmp.eq.s32.totalorder %s16, 0
      %p188 = por %p186, %p187
      %p189 = scmp.ne.s32.totalorder %s178, %s181
      %p190 = scmp.eq.s32.totalorder %s21, 1
      %p191 = por %p189, %p190
      %p192 = scmp.ne.s32.totalorder %s181, %s182
      %p193 = scmp.eq.s32.totalorder %s21, 0
      %p194 = por %p192, %p193
      %p195 = scmp.ne.s32.totalorder %s181, %s182
      %p196 = scmp.eq.s32.totalorder %s22, 1
      %p197 = por %p195, %p196
      %p199 = scmp.ne.s32.totalorder %s182, %s198
      %p200 = scmp.eq.s32.totalorder %s22, 0
      %p201 = por %p199, %p200
      %p202 = scmp.le.s32.totalorder 1, %s16
      %p203 = scmp.lt.s32.totalorder %s16, 3
      %p204 = pnand %p202, %p203
      %p205 = pneg %p204
      // Predicated region
      $region9: #{tpu_custom_call.1} parent=5 // pred_check
        _
      $region10: #{tpu_custom_call.1} parent=5 // pred_check_branch
        %207 = sbr.rel (%p204) target = $region12
      $region11: #{tpu_custom_call.1} parent=5 // pred_region
        %s208 = ssub.s32 %s16, 1
        // Predicated region
        $region13: #{tpu_custom_call.1} parent=11 // pred_check
          %p209 = pneg %p63
        $region14: #{tpu_custom_call.1} parent=11 // pred_check_branch
          %211 = sbr.rel (%p209) target = $region16
        $region15: #{tpu_custom_call.1} parent=11 // pred_region
          _
        $region16: #{tpu_custom_call.1} parent=11 // pred_fallthru
          _
        // Predicated region
        $region17: #{tpu_custom_call.1} parent=11 // pred_check
          %p212 = pneg %p84
        $region18: #{tpu_custom_call.1} parent=11 // pred_check_branch
          %214 = sbr.rel (%p212) target = $region20
        $region19: #{tpu_custom_call.1} parent=11 // pred_region
          _
        $region20: #{tpu_custom_call.1} parent=11 // pred_fallthru
          _
        // Predicated region
        $region21: #{tpu_custom_call.1} parent=11 // pred_check
          %p215 = pneg %p105
        $region22: #{tpu_custom_call.1} parent=11 // pred_check_branch
          %217 = sbr.rel (%p215) target = $region24
        $region23: #{tpu_custom_call.1} parent=11 // pred_region
          _
        $region24: #{tpu_custom_call.1} parent=11 // pred_fallthru
          _
        // Predicated region
        $region25: #{tpu_custom_call.1} parent=11 // pred_check
          %p218 = pneg %p126
        $region26: #{tpu_custom_call.1} parent=11 // pred_check_branch
          %220 = sbr.rel (%p218) target = $region28
        $region27: #{tpu_custom_call.1} parent=11 // pred_region
          _
        $region28: #{tpu_custom_call.1} parent=11 // pred_fallthru
          _
        // Predicated region
        $region29: #{tpu_custom_call.1} parent=11 // pred_check
          %p221 = pneg %p147
        $region30: #{tpu_custom_call.1} parent=11 // pred_check_branch
          %223 = sbr.rel (%p221) target = $region32
        $region31: #{tpu_custom_call.1} parent=11 // pred_region
          _
        $region32: #{tpu_custom_call.1} parent=11 // pred_fallthru
          _
        // Predicated region
        $region33: #{tpu_custom_call.1} parent=11 // pred_check
          %p224 = pneg %p168
        $region34: #{tpu_custom_call.1} parent=11 // pred_check_branch
          %226 = sbr.rel (%p224) target = $region36
        $region35: #{tpu_custom_call.1} parent=11 // pred_region
          _
        $region36: #{tpu_custom_call.1} parent=11 // pred_fallthru
          _
      $region12: #{tpu_custom_call.1} parent=5 // pred_fallthru
        _
      %p227 = scmp.lt.s32.totalorder %s16, 2
      // Predicated region
      $region37: #{tpu_custom_call.1} parent=5 // pred_check
        %p228 = pneg %p227
      $region38: #{tpu_custom_call.1} parent=5 // pred_check_branch
        %230 = sbr.rel (%p228) target = $region40
      $region39: #{tpu_custom_call.1} parent=5 // pred_region
        // Predicated region
        $region41: #{tpu_custom_call.1} parent=39 // pred_check
          %p231 = pneg %p36
        $region42: #{tpu_custom_call.1} parent=39 // pred_check_branch
          %233 = sbr.rel (%p231) target = $region44
        $region43: #{tpu_custom_call.1} parent=39 // pred_region
          %s234 = smul.u32 16, %s16
          %p235 = scmp.lt.s32.totalorder %s234, 31
          %s236 = scalar_select %p235, %s234, 31
          %s237 = smul.addr %s236, 8
          %s238 = scalar_lea.vmem %s0, %s237
          %s239 = smul.u32 16, %s16
        $region44: #{tpu_custom_call.1} parent=39 // pred_fallthru
          _
      $region40: #{tpu_custom_call.1} parent=5 // pred_fallthru
        _
      %p240 = scmp.le.s32.totalorder 1, %s16
      %p241 = scmp.lt.s32.totalorder %s16, 3
      %p242 = pnand %p240, %p241
      %p243 = pneg %p242
      // Predicated region
      $region45: #{tpu_custom_call.1} parent=5 // pred_check
        _
      $region46: #{tpu_custom_call.1} parent=5 // pred_check_branch
        %245 = sbr.rel (%p242) target = $region48
      $region47: #{tpu_custom_call.1} parent=5 // pred_region
        %s246 = ssub.s32 %s16, 1
        %s247 = smul.u32 16, %s21
        %p248 = scmp.lt.s32.totalorder %s247, 31
        %s249 = scalar_select %p248, %s247, 31
        %s250 = smul.addr %s249, 8
        %s251 = scalar_lea.vmem %s0, %s250
        %p252 = pneg %p42
        %p253 = pneg %p39
        %p254 = pneg %p63
        %p255 = pneg %p60
        %p256 = pneg %p84
        %p257 = pneg %p81
        %p258 = pneg %p105
        %p259 = pneg %p102
        %p260 = pneg %p126
        %p261 = pneg %p123
        %p262 = pneg %p147
        %p263 = pneg %p144
        %p264 = pneg %p168
        %p265 = pneg %p165
        %p266 = pneg %p194
        %p267 = pneg %p191
        %s268 = sand.u32 %s181, 1
        %s269 = scalar_lea.sflag [#allocation4], %s268
        %s270 = sand.u32 %s181, 1
        %s271 = smul.addr %s270, 16
        %s272 = scalar_lea.vmem [#allocation3], %s271
        %s273 = smul.u32 16, %s21
        %p274 = scmp.lt.s32.totalorder %s273, 31
        %s275 = scalar_select %p274, %s273, 31
        %s276 = smul.addr %s275, 8
        %s277 = scalar_lea.vmem %s0, %s276
        %s278 = smul.u32 16, %s21
        %v279 = vld [vmem:[%s277] sm:$0xff]
        %v280 = vld [vmem:[%s277 + $0x8] sm:$0xff]
        %v281 = vld [vmem:[%s277 + $0x10] sm:$0xff]
        %v282 = vld [vmem:[%s277 + $0x18] sm:$0xff]
        %v283 = vld [vmem:[%s277 + $0x20] sm:$0xff]
        %v284 = vld [vmem:[%s277 + $0x28] sm:$0xff]
        %v285 = vld [vmem:[%s277 + $0x30] sm:$0xff]
        %v286 = vld [vmem:[%s277 + $0x38] sm:$0xff]
        %v287 = vld [vmem:[%s277 + $0x40] sm:$0xff]
        %v288 = vld [vmem:[%s277 + $0x48] sm:$0xff]
        %v289 = vld [vmem:[%s277 + $0x50] sm:$0xff]
        %v290 = vld [vmem:[%s277 + $0x58] sm:$0xff]
        %v291 = vld [vmem:[%s277 + $0x60] sm:$0xff]
        %v292 = vld [vmem:[%s277 + $0x68] sm:$0xff]
        %v293 = vld [vmem:[%s277 + $0x70] sm:$0xff]
        %v294 = vld [vmem:[%s277 + $0x78] sm:$0xff]
        %v295 = vld [vmem:[%s1] sm:$0xff]
        %v296 = vld [vmem:[%s1 + $0x8] sm:$0xff]
        %v297 = vld [vmem:[%s2] sm:$0x1]
        %v299 = vlaneseq
        %v300 = vshrl.u32 %v299, 7
        %v301 = vsub.s32 0, %v300
        %v302 = vrot.slane %v297, %v301
        %vm304 = vcmask 130048
        %v306 = vsel %vm304, %v279, 0
        %v309 = vsel %vm304, %v280, 0
        %v312 = vsel %vm304, %v281, 0
        %v315 = vsel %vm304, %v282, 0
        %v318 = vsel %vm304, %v283, 0
        %v321 = vsel %vm304, %v284, 0
        %v324 = vsel %vm304, %v285, 0
        %v327 = vsel %vm304, %v286, 0
        %v330 = vsel %vm304, %v287, 0
        %v333 = vsel %vm304, %v288, 0
        %v336 = vsel %vm304, %v289, 0
        %v339 = vsel %vm304, %v290, 0
        %v342 = vsel %vm304, %v291, 0
        %v345 = vsel %vm304, %v292, 0
        %v348 = vsel %vm304, %v293, 0
        %v351 = vsel %vm304, %v294, 0
        %353 = vmatprep.subr.mxu0 0.0
        %354 = vmatpush1.msra.mxu0 %v295
        %355 = vmatprep.subr.mxu0 0.0
        %356 = vmatpush1.msra.mxu0 %v296
        %357 = vmatprep.subr.mxu0 0.0
        %358 = vmatpush1.msra.mxu0 0.0
        %359 = vmatprep.subr.mxu0 0.0
        %360 = vmatpush1.msra.mxu0 0.0
        %361 = vmatprep.subr.mxu0 0.0
        %362 = vmatpush1.msra.mxu0 0.0
        %363 = vmatprep.subr.mxu0 0.0
        %364 = vmatpush1.msra.mxu0 0.0
        %365 = vmatprep.subr.mxu0 0.0
        %366 = vmatpush1.msra.mxu0 0.0
        %367 = vmatprep.subr.mxu0 0.0
        %368 = vmatpush1.msra.mxu0 0.0
        %369 = vmatprep.subr.mxu0 0.0
        %370 = vmatpush1.msra.mxu0 0.0
        %371 = vmatprep.subr.mxu0 0.0
        %372 = vmatpush1.msra.mxu0 0.0
        %373 = vmatprep.subr.mxu0 0.0
        %374 = vmatpush1.msra.mxu0 0.0
        %375 = vmatprep.subr.mxu0 0.0
        %376 = vmatpush1.msra.mxu0 0.0
        %377 = vmatprep.subr.mxu0 0.0
        %378 = vmatpush1.msra.mxu0 0.0
        %379 = vmatprep.subr.mxu0 0.0
        %380 = vmatpush1.msra.mxu0 0.0
        %381 = vmatprep.subr.mxu0 0.0
        %382 = vmatpush1.msra.mxu0 0.0
        %383 = vmatprep.subr.mxu0 0.0
        %384 = vmatpush1.msra.mxu0 0.0
        %385 = vmatprep.subr.mxu0 0.0
        %386 = vmatpush1.msra.mxu0 0.0
        %387 = vmatprep.subr.mxu0 0.0
        %388 = vmatpush1.msra.mxu0 0.0
        %389 = vmatprep.subr.mxu0 0.0
        %390 = vmatpush1.msra.mxu0 0.0
        %391 = vmatprep.subr.mxu0 0.0
        %392 = vmatpush1.msra.mxu0 0.0
        %393 = vmatprep.subr.mxu0 0.0
        %394 = vmatpush1.msra.mxu0 0.0
        %395 = vmatprep.subr.mxu0 0.0
        %396 = vmatpush1.msra.mxu0 0.0
        %397 = vmatprep.subr.mxu0 0.0
        %398 = vmatpush1.msra.mxu0 0.0
        %399 = vmatprep.subr.mxu0 0.0
        %400 = vmatpush1.msra.mxu0 0.0
        %401 = vmatprep.subr.mxu0 0.0
        %402 = vmatpush1.msra.mxu0 0.0
        %403 = vmatprep.subr.mxu0 0.0
        %404 = vmatpush1.msra.mxu0 0.0
        %405 = vmatprep.subr.mxu0 0.0
        %406 = vmatpush1.msra.mxu0 0.0
        %407 = vmatprep.subr.mxu0 0.0
        %408 = vmatpush1.msra.mxu0 0.0
        %409 = vmatprep.subr.mxu0 0.0
        %410 = vmatpush1.msra.mxu0 0.0
        %411 = vmatprep.subr.mxu0 0.0
        %412 = vmatpush1.msra.mxu0 0.0
        %413 = vmatprep.subr.mxu0 0.0
        %414 = vmatpush1.msra.mxu0 0.0
        %415 = vmatprep.subr.mxu0 0.0
        %416 = vmatpush1.msra.mxu0 0.0
        %417 = vmatprep.mubr.f32.mxu0 0.0
        %418 = vmatmul.mubr.f32.gmra.mrb[0].mxu0 %v306
        %v419 = vpop.f32.mrb[0].mxu0
        %v420 = vadd.f32 %v302, %v419
        %v421 = vpop.f32.mrb[0].mxu0
        %422 = vmatprep.mubr.f32.mxu0 0.0
        %423 = vmatmul.mubr.f32.gmra.mrb[0].mxu0 %v309
        %v424 = vpop.f32.mrb[0].mxu0
        %v425 = vadd.f32 %v302, %v424
        %v426 = vpop.f32.mrb[0].mxu0
        %427 = vmatprep.mubr.f32.mxu0 0.0
        %428 = vmatmul.mubr.f32.gmra.mrb[0].mxu0 %v312
        %v429 = vpop.f32.mrb[0].mxu0
        %v430 = vadd.f32 %v302, %v429
        %v431 = vpop.f32.mrb[0].mxu0
        %432 = vmatprep.mubr.f32.mxu0 0.0
        %433 = vmatmul.mubr.f32.gmra.mrb[0].mxu0 %v315
        %v434 = vpop.f32.mrb[0].mxu0
        %v435 = vadd.f32 %v302, %v434
        %v436 = vpop.f32.mrb[0].mxu0
        %437 = vmatprep.mubr.f32.mxu0 0.0
        %438 = vmatmul.mubr.f32.gmra.mrb[0].mxu0 %v318
        %v439 = vpop.f32.mrb[0].mxu0
        %v440 = vadd.f32 %v302, %v439
        %v441 = vpop.f32.mrb[0].mxu0
        %442 = vmatprep.mubr.f32.mxu0 0.0
        %443 = vmatmul.mubr.f32.gmra.mrb[0].mxu0 %v321
        %v444 = vpop.f32.mrb[0].mxu0
        %v445 = vadd.f32 %v302, %v444
        %v446 = vpop.f32.mrb[0].mxu0
        %447 = vmatprep.mubr.f32.mxu0 0.0
        %448 = vmatmul.mubr.f32.gmra.mrb[0].mxu0 %v324
        %v449 = vpop.f32.mrb[0].mxu0
        %v450 = vadd.f32 %v302, %v449
        %v451 = vpop.f32.mrb[0].mxu0
        %452 = vmatprep.mubr.f32.mxu0 0.0
        %453 = vmatmul.mubr.f32.gmra.mrb[0].mxu0 %v327
        %v454 = vpop.f32.mrb[0].mxu0
        %v455 = vadd.f32 %v302, %v454
        %v456 = vpop.f32.mrb[0].mxu0
        %457 = vmatprep.mubr.f32.mxu0 0.0
        %458 = vmatmul.mubr.f32.gmra.mrb[0].mxu0 %v330
        %v459 = vpop.f32.mrb[0].mxu0
        %v460 = vadd.f32 %v302, %v459
        %v461 = vpop.f32.mrb[0].mxu0
        %462 = vmatprep.mubr.f32.mxu0 0.0
        %463 = vmatmul.mubr.f32.gmra.mrb[0].mxu0 %v333
        %v464 = vpop.f32.mrb[0].mxu0
        %v465 = vadd.f32 %v302, %v464
        %v466 = vpop.f32.mrb[0].mxu0
        %467 = vmatprep.mubr.f32.mxu0 0.0
        %468 = vmatmul.mubr.f32.gmra.mrb[0].mxu0 %v336
        %v469 = vpop.f32.mrb[0].mxu0
        %v470 = vadd.f32 %v302, %v469
        %v471 = vpop.f32.mrb[0].mxu0
        %472 = vmatprep.mubr.f32.mxu0 0.0
        %473 = vmatmul.mubr.f32.gmra.mrb[0].mxu0 %v339
        %v474 = vpop.f32.mrb[0].mxu0
        %v475 = vadd.f32 %v302, %v474
        %v476 = vpop.f32.mrb[0].mxu0
        %477 = vmatprep.mubr.f32.mxu0 0.0
        %478 = vmatmul.mubr.f32.gmra.mrb[0].mxu0 %v342
        %v479 = vpop.f32.mrb[0].mxu0
        %v480 = vadd.f32 %v302, %v479
        %v481 = vpop.f32.mrb[0].mxu0
        %482 = vmatprep.mubr.f32.mxu0 0.0
        %483 = vmatmul.mubr.f32.gmra.mrb[0].mxu0 %v345
        %v484 = vpop.f32.mrb[0].mxu0
        %v485 = vadd.f32 %v302, %v484
        %v486 = vpop.f32.mrb[0].mxu0
        %487 = vmatprep.mubr.f32.mxu0 0.0
        %488 = vmatmul.mubr.f32.gmra.mrb[0].mxu0 %v348
        %v489 = vpop.f32.mrb[0].mxu0
        %v490 = vadd.f32 %v302, %v489
        %v491 = vpop.f32.mrb[0].mxu0
        %492 = vmatprep.mubr.f32.mxu0 0.0
        %493 = vmatmul.mubr.f32.gmra.mrb[0].mxu0 %v351
        %v494 = vpop.f32.mrb[0].mxu0
        %v495 = vadd.f32 %v302, %v494
        %v496 = vpop.f32.mrb[0].mxu0
        %497 = vdwg.mxu0
        %v498 = vmax.f32 %v420, 0.0
        %v499 = vmax.f32 %v425, 0.0
        %v500 = vmax.f32 %v430, 0.0
        %v501 = vmax.f32 %v435, 0.0
        %v502 = vmax.f32 %v440, 0.0
        %v503 = vmax.f32 %v445, 0.0
        %v504 = vmax.f32 %v450, 0.0
        %v505 = vmax.f32 %v455, 0.0
        %v506 = vmax.f32 %v460, 0.0
        %v507 = vmax.f32 %v465, 0.0
        %v508 = vmax.f32 %v470, 0.0
        %v509 = vmax.f32 %v475, 0.0
        %v510 = vmax.f32 %v480, 0.0
        %v511 = vmax.f32 %v485, 0.0
        %v512 = vmax.f32 %v490, 0.0
        %v513 = vmax.f32 %v495, 0.0
        %vm514 = vcmask 261120
        %515 = vst.msk [vmem:[#allocation2] sm:$0xff] %vm514, %v498
        %516 = vst.msk [vmem:[#allocation2 + $0x10] sm:$0xff] %vm514, %v499
        %519 = vrot.lane.b32.xlu0 %v500, 32
        %v520 = vpop.permute.xlu0 %519
        %521 = vrot.lane.b32.xlu0 %v501, 32
        %v522 = vpop.permute.xlu0 %521
        %vm525 = vcmask 523520
        %526 = vst.msk [vmem:[#allocation2] sm:$0xff] %vm525, %v520
        %527 = vst.msk [vmem:[#allocation2 + $0x10] sm:$0xff] %vm525, %v522
        %530 = vrot.lane.b32.xlu0 %v502, 64
        %v531 = vpop.permute.xlu0 %530
        %532 = vrot.lane.b32.xlu0 %v503, 64
        %v533 = vpop.permute.xlu0 %532
        %vm536 = vcmask 785920
        %537 = vst.msk [vmem:[#allocation2] sm:$0xff] %vm536, %v531
        %538 = vst.msk [vmem:[#allocation2 + $0x10] sm:$0xff] %vm536, %v533
        %541 = vrot.lane.b32.xlu0 %v504, 96
        %v542 = vpop.permute.xlu0 %541
        %543 = vrot.lane.b32.xlu0 %v505, 96
        %v544 = vpop.permute.xlu0 %543
        %vm547 = vcmask 1048320
        %548 = vst.msk [vmem:[#allocation2] sm:$0xff] %vm547, %v542
        %549 = vst.msk [vmem:[#allocation2 + $0x10] sm:$0xff] %vm547, %v544
        %550 = vst.msk [vmem:[#allocation2 + $0x8] sm:$0xff] %vm514, %v506
        %551 = vst.msk [vmem:[#allocation2 + $0x18] sm:$0xff] %vm514, %v507
        %554 = vrot.lane.b32.xlu0 %v508, 32
        %v555 = vpop.permute.xlu0 %554
        %556 = vrot.lane.b32.xlu0 %v509, 32
        %v557 = vpop.permute.xlu0 %556
        %560 = vst.msk [vmem:[#allocation2 + $0x8] sm:$0xff] %vm525, %v555
        %561 = vst.msk [vmem:[#allocation2 + $0x18] sm:$0xff] %vm525, %v557
        %564 = vrot.lane.b32.xlu0 %v510, 64
        %v565 = vpop.permute.xlu0 %564
        %566 = vrot.lane.b32.xlu0 %v511, 64
        %v567 = vpop.permute.xlu0 %566
        %570 = vst.msk [vmem:[#allocation2 + $0x8] sm:$0xff] %vm536, %v565
        %571 = vst.msk [vmem:[#allocation2 + $0x18] sm:$0xff] %vm536, %v567
        %574 = vrot.lane.b32.xlu0 %v512, 96
        %v575 = vpop.permute.xlu0 %574
        %576 = vrot.lane.b32.xlu0 %v513, 96
        %v577 = vpop.permute.xlu0 %576
        %580 = vst.msk [vmem:[#allocation2 + $0x8] sm:$0xff] %vm547, %v575
        %581 = vst.msk [vmem:[#allocation2 + $0x18] sm:$0xff] %vm547, %v577
        %v582 = vld [vmem:[#allocation2] sm:$0xff]
        %v583 = vld [vmem:[#allocation2 + $0x8] sm:$0xff]
        %v584 = vld [vmem:[#allocation2 + $0x10] sm:$0xff]
        %v585 = vld [vmem:[#allocation2 + $0x18] sm:$0xff]
        %v586 = vld [vmem:[%s3] sm:$0xff]
        %v587 = vld [vmem:[%s3 + $0x8] sm:$0xff]
        %v588 = vld [vmem:[%s4] sm:$0xff]
        %v589 = vld [vmem:[%s4 + $0x8] sm:$0xff]
        %591 = vset.pattern.permute.xlu0 0
        %592 = vperm.xlu0 %591, %v588
        %v593 = vpop.permute.xlu0 %592
        %596 = vset.pattern.permute.xlu0 0
        %597 = vperm.xlu0 %596, %v589
        %v598 = vpop.permute.xlu0 %597
        %v601 = vsel %vm304, %v586, 0
        %v604 = vsel %vm304, %v587, 0
        %606 = vmatprep.subr.mxu0 %v583
        %607 = vmatpush1.msra.mxu0 %v582
        %608 = vmatprep.subr.mxu0 %v585
        %609 = vmatpush1.msra.mxu0 %v584
        %610 = vmatprep.subr.mxu0 0.0
        %611 = vmatpush1.msra.mxu0 0.0
        %612 = vmatprep.subr.mxu0 0.0
        %613 = vmatpush1.msra.mxu0 0.0
        %614 = vmatprep.subr.mxu0 0.0
        %615 = vmatpush1.msra.mxu0 0.0
        %616 = vmatprep.subr.mxu0 0.0
        %617 = vmatpush1.msra.mxu0 0.0
        %618 = vmatprep.subr.mxu0 0.0
        %619 = vmatpush1.msra.mxu0 0.0
        %620 = vmatprep.subr.mxu0 0.0
        %621 = vmatpush1.msra.mxu0 0.0
        %622 = vmatprep.subr.mxu0 0.0
        %623 = vmatpush1.msra.mxu0 0.0
        %624 = vmatprep.subr.mxu0 0.0
        %625 = vmatpush1.msra.mxu0 0.0
        %626 = vmatprep.subr.mxu0 0.0
        %627 = vmatpush1.msra.mxu0 0.0
        %628 = vmatprep.subr.mxu0 0.0
        %629 = vmatpush1.msra.mxu0 0.0
        %630 = vmatprep.subr.mxu0 0.0
        %631 = vmatpush1.msra.mxu0 0.0
        %632 = vmatprep.subr.mxu0 0.0
        %633 = vmatpush1.msra.mxu0 0.0
        %634 = vmatprep.subr.mxu0 0.0
        %635 = vmatpush1.msra.mxu0 0.0
        %636 = vmatprep.subr.mxu0 0.0
        %637 = vmatpush1.msra.mxu0 0.0
        %638 = vmatprep.subr.mxu0 0.0
        %639 = vmatpush1.msra.mxu0 0.0
        %640 = vmatprep.subr.mxu0 0.0
        %641 = vmatpush1.msra.mxu0 0.0
        %642 = vmatprep.subr.mxu0 0.0
        %643 = vmatpush1.msra.mxu0 0.0
        %644 = vmatprep.subr.mxu0 0.0
        %645 = vmatpush1.msra.mxu0 0.0
        %646 = vmatprep.subr.mxu0 0.0
        %647 = vmatpush1.msra.mxu0 0.0
        %648 = vmatprep.subr.mxu0 0.0
        %649 = vmatpush1.msra.mxu0 0.0
        %650 = vmatprep.subr.mxu0 0.0
        %651 = vmatpush1.msra.mxu0 0.0
        %652 = vmatprep.subr.mxu0 0.0
        %653 = vmatpush1.msra.mxu0 0.0
        %654 = vmatprep.subr.mxu0 0.0
        %655 = vmatpush1.msra.mxu0 0.0
        %656 = vmatprep.subr.mxu0 0.0
        %657 = vmatpush1.msra.mxu0 0.0
        %658 = vmatprep.subr.mxu0 0.0
        %659 = vmatpush1.msra.mxu0 0.0
        %660 = vmatprep.subr.mxu0 0.0
        %661 = vmatpush1.msra.mxu0 0.0
        %662 = vmatprep.subr.mxu0 0.0
        %663 = vmatpush1.msra.mxu0 0.0
        %664 = vmatprep.subr.mxu0 0.0
        %665 = vmatpush1.msra.mxu0 0.0
        %666 = vmatprep.subr.mxu0 0.0
        %667 = vmatpush1.msra.mxu0 0.0
        %668 = vmatprep.subr.mxu0 0.0
        %669 = vmatpush1.msra.mxu0 0.0
        %670 = vmatprep.mubr.f32.mxu0 0.0
        %671 = vmatmul.mubr.f32.gmra.mrb[0].mxu0 %v601
        %v672 = vpop.f32.mrb[0].mxu0
        %v673 = vadd.f32 %v593, %v672
        %v674 = vpop.f32.mrb[0].mxu0
        %v675 = vadd.f32 %v593, %v674
        %676 = vmatprep.mubr.f32.mxu0 0.0
        %677 = vmatmul.mubr.f32.gmra.mrb[0].mxu0 %v604
        %v678 = vpop.f32.mrb[0].mxu0
        %v679 = vadd.f32 %v598, %v678
        %v680 = vpop.f32.mrb[0].mxu0
        %v681 = vadd.f32 %v598, %v680
        %682 = vdwg.mxu0
        %v683 = vmax.f32 %v673, 0.0
        %v684 = vmax.f32 %v675, 0.0
        %v685 = vmax.f32 %v679, 0.0
        %v686 = vmax.f32 %v681, 0.0
        %v687 = vld [vmem:[%s5] sm:$0xff]
        %v688 = vld [vmem:[%s6] sm:$0xff]
        %690 = vset.pattern.permute.xlu0 0
        %691 = vperm.xlu0 %690, %v688
        %v692 = vpop.permute.xlu0 %691
        %v695 = vsel %vm304, %v687, 0
        %697 = vmatprep.subr.mxu0 %v684
        %698 = vmatpush1.msra.mxu0 %v683
        %699 = vmatprep.subr.mxu0 %v686
        %700 = vmatpush1.msra.mxu0 %v685
        %701 = vmatprep.subr.mxu0 0.0
        %702 = vmatpush1.msra.mxu0 0.0
        %703 = vmatprep.subr.mxu0 0.0
        %704 = vmatpush1.msra.mxu0 0.0
        %705 = vmatprep.subr.mxu0 0.0
        %706 = vmatpush1.msra.mxu0 0.0
        %707 = vmatprep.subr.mxu0 0.0
        %708 = vmatpush1.msra.mxu0 0.0
        %709 = vmatprep.subr.mxu0 0.0
        %710 = vmatpush1.msra.mxu0 0.0
        %711 = vmatprep.subr.mxu0 0.0
        %712 = vmatpush1.msra.mxu0 0.0
        %713 = vmatprep.subr.mxu0 0.0
        %714 = vmatpush1.msra.mxu0 0.0
        %715 = vmatprep.subr.mxu0 0.0
        %716 = vmatpush1.msra.mxu0 0.0
        %717 = vmatprep.subr.mxu0 0.0
        %718 = vmatpush1.msra.mxu0 0.0
        %719 = vmatprep.subr.mxu0 0.0
        %720 = vmatpush1.msra.mxu0 0.0
        %721 = vmatprep.subr.mxu0 0.0
        %722 = vmatpush1.msra.mxu0 0.0
        %723 = vmatprep.subr.mxu0 0.0
        %724 = vmatpush1.msra.mxu0 0.0
        %725 = vmatprep.subr.mxu0 0.0
        %726 = vmatpush1.msra.mxu0 0.0
        %727 = vmatprep.subr.mxu0 0.0
        %728 = vmatpush1.msra.mxu0 0.0
        %729 = vmatprep.subr.mxu0 0.0
        %730 = vmatpush1.msra.mxu0 0.0
        %731 = vmatprep.subr.mxu0 0.0
        %732 = vmatpush1.msra.mxu0 0.0
        %733 = vmatprep.subr.mxu0 0.0
        %734 = vmatpush1.msra.mxu0 0.0
        %735 = vmatprep.subr.mxu0 0.0
        %736 = vmatpush1.msra.mxu0 0.0
        %737 = vmatprep.subr.mxu0 0.0
        %738 = vmatpush1.msra.mxu0 0.0
        %739 = vmatprep.subr.mxu0 0.0
        %740 = vmatpush1.msra.mxu0 0.0
        %741 = vmatprep.subr.mxu0 0.0
        %742 = vmatpush1.msra.mxu0 0.0
        %743 = vmatprep.subr.mxu0 0.0
        %744 = vmatpush1.msra.mxu0 0.0
        %745 = vmatprep.subr.mxu0 0.0
        %746 = vmatpush1.msra.mxu0 0.0
        %747 = vmatprep.subr.mxu0 0.0
        %748 = vmatpush1.msra.mxu0 0.0
        %749 = vmatprep.subr.mxu0 0.0
        %750 = vmatpush1.msra.mxu0 0.0
        %751 = vmatprep.subr.mxu0 0.0
        %752 = vmatpush1.msra.mxu0 0.0
        %753 = vmatprep.subr.mxu0 0.0
        %754 = vmatpush1.msra.mxu0 0.0
        %755 = vmatprep.subr.mxu0 0.0
        %756 = vmatpush1.msra.mxu0 0.0
        %757 = vmatprep.subr.mxu0 0.0
        %758 = vmatpush1.msra.mxu0 0.0
        %759 = vmatprep.subr.mxu0 0.0
        %760 = vmatpush1.msra.mxu0 0.0
        %761 = vmatprep.mubr.f32.mxu0 0.0
        %762 = vmatmul.mubr.f32.gmra.mrb[0].mxu0 %v695
        %v763 = vpop.f32.mrb[0].mxu0
        %v764 = vadd.f32 %v692, %v763
        %v765 = vpop.f32.mrb[0].mxu0
        %v766 = vadd.f32 %v692, %v765
        %767 = vdwg.mxu0
        %768 = vst [vmem:[%s272] sm:$0xff] %v764
        %769 = vst [vmem:[%s272 + $0x8] sm:$0xff] %v766
        %s770 = sand.u32 %s181, 1
        %s771 = scalar_lea.sflag [#allocation4], %s770
        %s772 = sand.u32 %s181, 1
        %s773 = smul.addr %s772, 16
        %s774 = scalar_lea.vmem [#allocation3], %s773
        // Predicated region
        $region49: #{tpu_custom_call.1} parent=47 // pred_check
          %p775 = pneg %p191
        $region50: #{tpu_custom_call.1} parent=47 // pred_check_branch
          %777 = sbr.rel (%p775) target = $region52
        $region51: #{tpu_custom_call.1} parent=47 // pred_region
          %s779 = ssub.s32 256, 256
          %780 = vsyncadd %s771, %s779
          %s781 = smul.addr %s21, 2
          %s782 = smul.addr %s781, 128
          %s783 = scalar_lea.hbm %s7, %s782
          %s785 = sshll.u32 %s774, 4
          %s786 = int_to_ptr.vmem [resolvable:$true] %s785
          %788 = dma.vmem_to_hbm [thread:$0]  %s786, 256, %s783, %s771
        $region52: #{tpu_custom_call.1} parent=47 // pred_fallthru
          _
      $region48: #{tpu_custom_call.1} parent=5 // pred_fallthru
        _
      %p789 = scmp.le.s32.totalorder 2, %s16
      // Predicated region
      $region53: #{tpu_custom_call.1} parent=5 // pred_check
        %p790 = pneg %p789
      $region54: #{tpu_custom_call.1} parent=5 // pred_check_branch
        %792 = sbr.rel (%p790) target = $region56
      $region55: #{tpu_custom_call.1} parent=5 // pred_region
        %s793 = ssub.s32 %s16, 2
        // Predicated region
        $region57: #{tpu_custom_call.1} parent=55 // pred_check
          %p794 = pneg %p197
        $region58: #{tpu_custom_call.1} parent=55 // pred_check_branch
          %796 = sbr.rel (%p794) target = $region60
        $region59: #{tpu_custom_call.1} parent=55 // pred_region
          %s797 = sand.u32 %s182, 1
          %s798 = scalar_lea.sflag [#allocation4], %s797
          %s799 = sand.u32 %s182, 1
          %s800 = smul.addr %s799, 16
          %s801 = scalar_lea.vmem [#allocation3], %s800
          %802 = dma.done %s798, 256
        $region60: #{tpu_custom_call.1} parent=55 // pred_fallthru
          _
      $region56: #{tpu_custom_call.1} parent=5 // pred_fallthru
        _
    $region6: #{tpu_custom_call.1} parent=1 // loop_footer
      %s20 = sadd.s32 1, %s16
    $region7: #{tpu_custom_call.1} parent=1 // loop_footer_branch
      %15 = sbr.rel target = $region3
    $region8: #{tpu_custom_call.1} parent=1 // loop_exit
      _
    %803 = vsyncpa [#allocation4], 1
    %s804 = scalar_lea.sflag [#allocation4], 1
    %805 = vsyncpa %s804, 1

</llo_original>
